<compile_context>
chip_gen: v7x
topology: tpu7x:2x2x1
jax: 0.10.0
libtpu: 0.0.40
codegen_flags: <defaults>
</compile_context>

<pallas_src>
import functools

import jax
import jax.numpy as jnp
from jax import lax
from jax.experimental import pallas as pl
from jax.experimental.pallas import tpu as pltpu


def _build_tap_table(split_indexes, w_hw, b_hw, w_w, b_w, w_h, b_h,
                     ks_hw, ks_w, ks_h):
    """Fuse identity + 3 depthwise branches into one (T, C) tap-weight table.

    Returns (union_taps, branch_taps, wc, bc):
      union_taps  : tuple of (t, dy, dx) over the union footprint (31 taps)
      branch_taps : 3-tuple of (taps, ph, pw) for the 3x3 / 1x15 / 13x1 branch
      wc          : (T, C) f32 per-channel weight for every tap (0 if unused)
      bc          : (C,)   f32 per-channel bias (0 for identity channels)
    """
    s_id = split_indexes[0]
    offs, index = [], {}

    def _add(dy, dx):
        if (dy, dx) not in index:
            index[(dy, dx)] = len(offs)
            offs.append((dy, dx))

    _add(0, 0)                                   # identity tap first
    for kh, kw in (ks_hw, ks_w, ks_h):
        for i in range(kh):
            for j in range(kw):
                _add(i - kh // 2, j - kw // 2)
    T = len(offs)

    def branch_cols(w, kh, kw):
        cols = jnp.zeros((T, w.shape[0]), jnp.float32)
        for i in range(kh):
            for j in range(kw):
                t = index[(i - kh // 2, j - kw // 2)]
                cols = cols.at[t, :].set(w[:, i, j].astype(jnp.float32))
        return cols

    id_cols = jnp.zeros((T, s_id), jnp.float32).at[index[(0, 0)], :].set(1.0)
    wc = jnp.concatenate(
        [id_cols,
         branch_cols(w_hw, *ks_hw),
         branch_cols(w_w, *ks_w),
         branch_cols(w_h, *ks_h)], axis=1)
    bc = jnp.concatenate(
        [jnp.zeros((s_id,), jnp.float32),
         b_hw.astype(jnp.float32),
         b_w.astype(jnp.float32),
         b_h.astype(jnp.float32)])

    union_taps = tuple((index[o], o[0], o[1]) for o in offs)
    branch_taps = tuple(
        (tuple((index[(i - kh // 2, j - kw // 2)], i - kh // 2, j - kw // 2)
               for i in range(kh) for j in range(kw)),
         kh // 2, kw // 2)
        for kh, kw in (ks_hw, ks_w, ks_h))
    return union_taps, branch_taps, wc, bc


def _accumulate(x_ref, w_ref, b_ref, o_ref, xpad_ref, *, taps, H, W,
                PH, PWa, ph, pw):
    """Depthwise accumulation for one (batch, channel-block) tile.

    x_ref    : (1, H, W, Cb)  input tile (channels on the 128-lane axis)
    w_ref    : (T, Cb)        per-tap per-channel weights (shared table)
    b_ref    : (1, Cb)        per-channel bias
    o_ref    : (1, H, W, Cb)  output tile
    xpad_ref : (Hp, Wp, Cb)   f32 VMEM scratch holding the zero-haloed tile
    taps     : static tuple of (table_row, dy, dx) for this tap set
    ph, pw   : halo extent actually read by this tap set (<= PH / PW)
    """
    f32 = jnp.float32
    Hp, Wp, Cb = xpad_ref.shape

    # --- zero only the halo strips this tap set reads ------------------------
    if ph > 0:
        xpad_ref[PH - ph:PH, :, :] = jnp.zeros((ph, Wp, Cb), f32)
        xpad_ref[PH + H:PH + H + ph, :, :] = jnp.zeros((ph, Wp, Cb), f32)
    if pw > 0:
        xpad_ref[:, PWa - pw:PWa, :] = jnp.zeros((Hp, pw, Cb), f32)
        xpad_ref[:, PWa + W:PWa + W + pw, :] = jnp.zeros((Hp, pw, Cb), f32)

    # --- stage the input tile at a sublane-aligned (multiple-of-8) offset ----
    xpad_ref[PH:PH + H, PWa:PWa + W, :] = x_ref[0].astype(f32)

    # --- hoist the per-tap weight rows + bias out of the row loop ------------
    wvs = [w_ref[t:t + 1, :] for (t, _, _) in taps]          # each (1, Cb)
    bv = b_ref[0:1, :]                                       # (1, Cb)

    def row_body(r, carry):
        # First tap is fused with the bias into the accumulator init; the
        # accumulator (1, W, Cb) stays register-resident across the unrolled
        # taps and is stored exactly once per row.
        t0, dy0, dx0 = taps[0]
        acc = wvs[0] * xpad_ref[pl.ds(r + PH + dy0, 1),
                                pl.ds(PWa + dx0, W), :] + bv
        for i in range(1, len(taps)):
            _, dy, dx = taps[i]
            acc = acc + wvs[i] * xpad_ref[pl.ds(r + PH + dy, 1),
                                          pl.ds(PWa + dx, W), :]
        o_ref[0, pl.ds(r, 1), :, :] = acc.astype(o_ref.dtype)
        return carry

    lax.fori_loop(0, H, row_body, 0)


def _inception_dw_kernel(x_ref, w_ref, b_ref, o_ref, xpad_ref, *,
                         union_taps, branch_info, H, W, PH, PW, PWa):
    if branch_info is None:
        # Channel blocks straddle branch boundaries: run the exact union
        # footprint (identity channels carry weight 1.0 at (0,0), 0 elsewhere).
        _accumulate(x_ref, w_ref, b_ref, o_ref, xpad_ref, taps=union_taps,
                    H=H, W=W, PH=PH, PWa=PWa, ph=PH, pw=PW)
        return

    # Branch-specialized dispatch: the channel-block axis is aligned with the
    # (identity, 3x3, 1x15, 13x1) split, so the branch id is a pure function
    # of pl.program_id(1) and each block runs only its own taps.
    nblocks, branch_taps = branch_info
    c = pl.program_id(1)
    b1 = nblocks[0]
    b2 = b1 + nblocks[1]
    b3 = b2 + nblocks[2]
    bid = ((c >= b1).astype(jnp.int32) + (c >= b2).astype(jnp.int32)
           + (c >= b3).astype(jnp.int32))

    @pl.when(bid == 0)
    def _():                       # identity branch: a straight copy
        o_ref[...] = x_ref[...]

    for k in range(3):
        tlist, ph_k, pw_k = branch_taps[k]

        @pl.when(bid == k + 1)
        def _(tlist=tlist, ph_k=ph_k, pw_k=pw_k):
            _accumulate(x_ref, w_ref, b_ref, o_ref, xpad_ref, taps=tlist,
                        H=H, W=W, PH=PH, PWa=PWa, ph=ph_k, pw=pw_k)


def inception_dw_conv2d(x, wc, bc, union_taps, branch_taps, split_indexes):
    """Fused InceptionDWConv2d forward.  x: (N, C, H, W) -> (N, C, H, W)."""
    N, C, H, W = x.shape
    T = wc.shape[0]
    PH = max(abs(dy) for (_, dy, _) in union_taps)
    PW = max(abs(dx) for (_, _, dx) in union_taps)
    PWa = ((PW + 7) // 8) * 8 if PW > 0 else 0      # sublane-aligned left pad
    Wp = ((PWa + W + PW + 7) // 8) * 8              # padded W, multiple of 8
    Hp = H + 2 * PH

    # Layout plumbing only: channels-last so C rides the lane axis.  In a
    # channels-last network these transposes disappear.
    xt = jnp.transpose(x, (0, 2, 3, 1))             # (N, H, W, C)

    # Lane-dim blocks must be a multiple of 128 or the full C.
    Cb = 128 if C % 128 == 0 else C
    nC = C // Cb

    # Branch specialization only when every split is a whole number of blocks.
    branch_info = None
    if nC > 1 and all(s % Cb == 0 for s in split_indexes):
        branch_info = (tuple(s // Cb for s in split_indexes), branch_taps)

    kernel = functools.partial(
        _inception_dw_kernel, union_taps=union_taps, branch_info=branch_info,
        H=H, W=W, PH=PH, PW=PW, PWa=PWa)

    # Advisory cost estimate (effective taps per channel when specialized).
    if branch_info is not None:
        mac_ch = (split_indexes[0] * 1
                  + split_indexes[1] * len(branch_taps[0][0])
                  + split_indexes[2] * len(branch_taps[1][0])
                  + split_indexes[3] * len(branch_taps[2][0]))
    else:
        mac_ch = C * T
    itemsize = jnp.dtype(x.dtype).itemsize

    # Only raise the scoped-VMEM limit when the footprint actually needs it.
    # TODO(synk): add an H-block grid axis (halo rows via index_map) for large
    # H*W instead of just raising the limit.
    vmem_est = (4 * H * W * Cb * itemsize          # double-buffered in + out
                + Hp * Wp * Cb * 4                 # padded scratch
                + 2 * (T + 1) * Cb * 4)            # weights + bias
    cp_kwargs = dict(dimension_semantics=("parallel", "parallel"))
    if vmem_est > 12 * 1024 * 1024:
        cp_kwargs["vmem_limit_bytes"] = int(min(vmem_est * 2, 64 * 1024 * 1024))

    yt = pl.pallas_call(
        kernel,
        out_shape=jax.ShapeDtypeStruct((N, H, W, C), x.dtype),
        grid=(N, nC),
        in_specs=[
            pl.BlockSpec((1, H, W, Cb), lambda n, c: (n, 0, 0, c)),   # x tile
            pl.BlockSpec((T, Cb), lambda n, c: (0, c)),               # weights
            pl.BlockSpec((1, Cb), lambda n, c: (0, c)),               # bias
        ],
        out_specs=pl.BlockSpec((1, H, W, Cb), lambda n, c: (n, 0, 0, c)),
        scratch_shapes=[pltpu.VMEM((Hp, Wp, Cb), jnp.float32)],
        compiler_params=pltpu.CompilerParams(**cp_kwargs),
        cost_estimate=pl.CostEstimate(
            flops=2 * N * H * W * mac_ch,
            transcendentals=0,
            bytes_accessed=2 * N * H * W * C * itemsize + (T + 1) * C * 4),
    )(xt, wc, bc.reshape(1, C))
    return jnp.transpose(yt, (0, 3, 1, 2))          # back to NCHW


class InceptionDWConv2dPallas:
    """Pallas port of the PyTorch InceptionDWConv2d module (NCHW in/out)."""

    def __init__(self, in_channels, square_kernel_size=3,
                 band_kernel_size_h=13, band_kernel_size_w=15,
                 branch_ratio=0.25, key=None):
        gc = int(in_channels * branch_ratio)
        self.gc = gc
        self.in_channels = in_channels
        self.split_indexes = (in_channels - 3 * gc, gc, gc, gc)
        self.ks_hw = (square_kernel_size, square_kernel_size)
        self.ks_w = (1, band_kernel_size_w)
        self.ks_h = (band_kernel_size_h, 1)

        key = jax.random.PRNGKey(42) if key is None else key
        ks = jax.random.split(key, 6)

        def init_w(k, kh, kw):   # PyTorch-style bound ~ 1/sqrt(fan_in)
            bound = 1.0 / float(kh * kw) ** 0.5
            return jax.random.uniform(k, (gc, kh, kw), jnp.float32, -bound, bound)

        def init_b(k, kh, kw):
            bound = 1.0 / float(kh * kw) ** 0.5
            return jax.random.uniform(k, (gc,), jnp.float32, -bound, bound)

        self.w_hw = init_w(ks[0], *self.ks_hw)
        self.b_hw = init_b(ks[1], *self.ks_hw)
        self.w_w = init_w(ks[2], *self.ks_w)
        self.b_w = init_b(ks[3], *self.ks_w)
        self.w_h = init_w(ks[4], *self.ks_h)
        self.b_h = init_b(ks[5], *self.ks_h)

        (self.union_taps, self.branch_taps,
         self.wc, self.bc) = _build_tap_table(
            self.split_indexes, self.w_hw, self.b_hw, self.w_w, self.b_w,
            self.w_h, self.b_h, self.ks_hw, self.ks_w, self.ks_h)

    def __call__(self, x):
        return inception_dw_conv2d(x, self.wc, self.bc, self.union_taps,
                                   self.branch_taps, self.split_indexes)


def _ref_dwconv(x, w, b, kh, kw):
    """Pure-JAX reference (lax depthwise conv) for correctness checking."""
    out = jax.lax.conv_general_dilated(
        x, w[:, None, :, :], (1, 1),
        ((kh // 2, kh // 2), (kw // 2, kw // 2)),
        dimension_numbers=("NCHW", "OIHW", "NCHW"),
        feature_group_count=x.shape[1],
        precision=jax.lax.Precision.HIGHEST)
    return out + b[None, :, None, None]


def _reference_forward(x, mod):
    s_id = mod.split_indexes[0]
    gc = mod.gc
    return jnp.concatenate(
        [
            x[:, :s_id],
            _ref_dwconv(x[:, s_id:s_id + gc], mod.w_hw, mod.b_hw, *mod.ks_hw),
            _ref_dwconv(x[:, s_id + gc:s_id + 2 * gc], mod.w_w, mod.b_w, *mod.ks_w),
            _ref_dwconv(x[:, s_id + 2 * gc:s_id + 3 * gc], mod.w_h, mod.b_h, *mod.ks_h),
        ],
        axis=1,
    )


if __name__ == "__main__":
    # --- case 1: small channel count -> union-footprint path -----------------
    N, C, H, W = 2, 16, 16, 16          # in_channels=16 -> gc=4, identity=4
    x = jax.random.normal(jax.random.PRNGKey(0), (N, C, H, W), jnp.float32)
    mod = InceptionDWConv2dPallas(in_channels=C, key=jax.random.PRNGKey(1))
    out = jax.block_until_ready(mod(x))
    assert out.shape == (N, C, H, W), out.shape
    ref = _reference_forward(x, mod)
    assert jnp.allclose(out, ref, atol=1e-4, rtol=1e-4), float(
        jnp.max(jnp.abs(out - ref)))

    # --- case 2: 128-aligned channels -> branch-specialized path -------------
    N2, C2, H2, W2 = 1, 512, 16, 16     # gc=128 -> Cb=128 blocks align to split
    x2 = jax.random.normal(jax.random.PRNGKey(2), (N2, C2, H2, W2), jnp.float32)
    mod2 = InceptionDWConv2dPallas(in_channels=C2, key=jax.random.PRNGKey(3))
    out2 = jax.block_until_ready(mod2(x2))
    assert out2.shape == (N2, C2, H2, W2), out2.shape
    ref2 = _reference_forward(x2, mod2)
    assert jnp.allclose(out2, ref2, atol=1e-4, rtol=1e-4), float(
        jnp.max(jnp.abs(out2 - ref2)))

    print("KERNEL_OK")
</pallas_src>

<mosaic_0001>
module attributes {stable_mosaic.version = 11 : i64} {
  func.func @_inception_dw_kernel(%arg0: i32, %arg1: i32, %arg2: memref<1x16x16x16xf32, #tpu.memory_space<vmem>>, %arg3: memref<31x16xf32, #tpu.memory_space<vmem>>, %arg4: memref<1x16xf32, #tpu.memory_space<vmem>>, %arg5: memref<1x16x16x16xf32, #tpu.memory_space<vmem>>, %arg6: memref<28x32x16xf32, #tpu.memory_space<vmem>>) attributes {dimension_semantics = [#tpu.dimension_semantics<parallel>, #tpu.dimension_semantics<parallel>], iteration_bounds = array<i64: 2, 1>, scalar_prefetch = 0 : i64, scratch_operands = 1 : i64, tpu.core_type = #tpu.core_type<tc>, window_params = [{transform_indices = @transform_0, window_bounds = array<i64: 1, 16, 16, 16>}, {transform_indices = @transform_1, window_bounds = array<i64: 31, 16>}, {transform_indices = @transform_2, window_bounds = array<i64: 1, 16>}, {transform_indices = @transform_3, window_bounds = array<i64: 1, 16, 16, 16>}]} {
    %cst = arith.constant 0.000000e+00 : f32
    %0 = vector.broadcast %cst : f32 to vector<6x32x16xf32>
    %c0 = arith.constant 0 : index
    %c0_0 = arith.constant 0 : index
    %c0_1 = arith.constant 0 : index
    %1 = vector.load %arg6[%c0, %c0_0, %c0_1] : memref<28x32x16xf32, #tpu.memory_space<vmem>>, vector<6x32x16xf32>
    tpu.vector_store %arg6[%c0, %c0_0, %c0_1], %0 {strides = array<i32>} : memref<28x32x16xf32, #tpu.memory_space<vmem>>, vector<6x32x16xf32>,
    %cst_2 = arith.constant 0.000000e+00 : f32
    %2 = vector.broadcast %cst_2 : f32 to vector<6x32x16xf32>
    %c22 = arith.constant 22 : index
    %c0_3 = arith.constant 0 : index
    %c0_4 = arith.constant 0 : index
    %3 = vector.load %arg6[%c22, %c0_3, %c0_4] : memref<28x32x16xf32, #tpu.memory_space<vmem>>, vector<6x32x16xf32>
    tpu.vector_store %arg6[%c22, %c0_3, %c0_4], %2 {strides = array<i32>} : memref<28x32x16xf32, #tpu.memory_space<vmem>>, vector<6x32x16xf32>,
    %cst_5 = arith.constant 0.000000e+00 : f32
    %4 = vector.broadcast %cst_5 : f32 to vector<28x7x16xf32>
    %c0_6 = arith.constant 0 : index
    %c1 = arith.constant 1 : index
    %c0_7 = arith.constant 0 : index
    %5 = vector.load %arg6[%c0_6, %c1, %c0_7] : memref<28x32x16xf32, #tpu.memory_space<vmem>>, vector<28x7x16xf32>
    tpu.vector_store %arg6[%c0_6, %c1, %c0_7], %4 {strides = array<i32>} : memref<28x32x16xf32, #tpu.memory_space<vmem>>, vector<28x7x16xf32>,
    %cst_8 = arith.constant 0.000000e+00 : f32
    %6 = vector.broadcast %cst_8 : f32 to vector<28x7x16xf32>
    %c0_9 = arith.constant 0 : index
    %c24 = arith.constant 24 : index
    %c0_10 = arith.constant 0 : index
    %7 = vector.load %arg6[%c0_9, %c24, %c0_10] : memref<28x32x16xf32, #tpu.memory_space<vmem>>, vector<28x7x16xf32>
    tpu.vector_store %arg6[%c0_9, %c24, %c0_10], %6 {strides = array<i32>} : memref<28x32x16xf32, #tpu.memory_space<vmem>>, vector<28x7x16xf32>,
    %c0_11 = arith.constant 0 : index
    %c0_12 = arith.constant 0 : index
    %c0_13 = arith.constant 0 : index
    %c0_14 = arith.constant 0 : index
    %8 = vector.load %arg2[%c0_11, %c0_12, %c0_13, %c0_14] : memref<1x16x16x16xf32, #tpu.memory_space<vmem>>, vector<1x16x16x16xf32>
    %9 = vector.shape_cast %8 : vector<1x16x16x16xf32> to vector<16x16x16xf32>
    %c6 = arith.constant 6 : index
    %c8 = arith.constant 8 : index
    %c0_15 = arith.constant 0 : index
    %10 = vector.load %arg6[%c6, %c8, %c0_15] : memref<28x32x16xf32, #tpu.memory_space<vmem>>, vector<16x16x16xf32>
    tpu.vector_store %arg6[%c6, %c8, %c0_15], %9 {strides = array<i32>} : memref<28x32x16xf32, #tpu.memory_space<vmem>>, vector<16x16x16xf32>,
    %c0_16 = arith.constant 0 : index
    %c0_17 = arith.constant 0 : index
    %11 = vector.load %arg3[%c0_16, %c0_17] : memref<31x16xf32, #tpu.memory_space<vmem>>, vector<1x16xf32>
    %c1_18 = arith.constant 1 : index
    %c0_19 = arith.constant 0 : index
    %12 = vector.load %arg3[%c1_18, %c0_19] : memref<31x16xf32, #tpu.memory_space<vmem>>, vector<1x16xf32>
    %c2 = arith.constant 2 : index
    %c0_20 = arith.constant 0 : index
    %13 = vector.load %arg3[%c2, %c0_20] : memref<31x16xf32, #tpu.memory_space<vmem>>, vector<1x16xf32>
    %c3 = arith.constant 3 : index
    %c0_21 = arith.constant 0 : index
    %14 = vector.load %arg3[%c3, %c0_21] : memref<31x16xf32, #tpu.memory_space<vmem>>, vector<1x16xf32>
    %c4 = arith.constant 4 : index
    %c0_22 = arith.constant 0 : index
    %15 = vector.load %arg3[%c4, %c0_22] : memref<31x16xf32, #tpu.memory_space<vmem>>, vector<1x16xf32>
    %c5 = arith.constant 5 : index
    %c0_23 = arith.constant 0 : index
    %16 = vector.load %arg3[%c5, %c0_23] : memref<31x16xf32, #tpu.memory_space<vmem>>, vector<1x16xf32>
    %c6_24 = arith.constant 6 : index
    %c0_25 = arith.constant 0 : index
    %17 = vector.load %arg3[%c6_24, %c0_25] : memref<31x16xf32, #tpu.memory_space<vmem>>, vector<1x16xf32>
    %c7 = arith.constant 7 : index
    %c0_26 = arith.constant 0 : index
    %18 = vector.load %arg3[%c7, %c0_26] : memref<31x16xf32, #tpu.memory_space<vmem>>, vector<1x16xf32>
    %c8_27 = arith.constant 8 : index
    %c0_28 = arith.constant 0 : index
    %19 = vector.load %arg3[%c8_27, %c0_28] : memref<31x16xf32, #tpu.memory_space<vmem>>, vector<1x16xf32>
    %c9 = arith.constant 9 : index
    %c0_29 = arith.constant 0 : index
    %20 = vector.load %arg3[%c9, %c0_29] : memref<31x16xf32, #tpu.memory_space<vmem>>, vector<1x16xf32>
    %c10 = arith.constant 10 : index
    %c0_30 = arith.constant 0 : index
    %21 = vector.load %arg3[%c10, %c0_30] : memref<31x16xf32, #tpu.memory_space<vmem>>, vector<1x16xf32>
    %c11 = arith.constant 11 : index
    %c0_31 = arith.constant 0 : index
    %22 = vector.load %arg3[%c11, %c0_31] : memref<31x16xf32, #tpu.memory_space<vmem>>, vector<1x16xf32>
    %c12 = arith.constant 12 : index
    %c0_32 = arith.constant 0 : index
    %23 = vector.load %arg3[%c12, %c0_32] : memref<31x16xf32, #tpu.memory_space<vmem>>, vector<1x16xf32>
    %c13 = arith.constant 13 : index
    %c0_33 = arith.constant 0 : index
    %24 = vector.load %arg3[%c13, %c0_33] : memref<31x16xf32, #tpu.memory_space<vmem>>, vector<1x16xf32>
    %c14 = arith.constant 14 : index
    %c0_34 = arith.constant 0 : index
    %25 = vector.load %arg3[%c14, %c0_34] : memref<31x16xf32, #tpu.memory_space<vmem>>, vector<1x16xf32>
    %c15 = arith.constant 15 : index
    %c0_35 = arith.constant 0 : index
    %26 = vector.load %arg3[%c15, %c0_35] : memref<31x16xf32, #tpu.memory_space<vmem>>, vector<1x16xf32>
    %c16 = arith.constant 16 : index
    %c0_36 = arith.constant 0 : index
    %27 = vector.load %arg3[%c16, %c0_36] : memref<31x16xf32, #tpu.memory_space<vmem>>, vector<1x16xf32>
    %c17 = arith.constant 17 : index
    %c0_37 = arith.constant 0 : index
    %28 = vector.load %arg3[%c17, %c0_37] : memref<31x16xf32, #tpu.memory_space<vmem>>, vector<1x16xf32>
    %c18 = arith.constant 18 : index
    %c0_38 = arith.constant 0 : index
    %29 = vector.load %arg3[%c18, %c0_38] : memref<31x16xf32, #tpu.memory_space<vmem>>, vector<1x16xf32>
    %c19 = arith.constant 19 : index
    %c0_39 = arith.constant 0 : index
    %30 = vector.load %arg3[%c19, %c0_39] : memref<31x16xf32, #tpu.memory_space<vmem>>, vector<1x16xf32>
    %c20 = arith.constant 20 : index
    %c0_40 = arith.constant 0 : index
    %31 = vector.load %arg3[%c20, %c0_40] : memref<31x16xf32, #tpu.memory_space<vmem>>, vector<1x16xf32>
    %c21 = arith.constant 21 : index
    %c0_41 = arith.constant 0 : index
    %32 = vector.load %arg3[%c21, %c0_41] : memref<31x16xf32, #tpu.memory_space<vmem>>, vector<1x16xf32>
    %c22_42 = arith.constant 22 : index
    %c0_43 = arith.constant 0 : index
    %33 = vector.load %arg3[%c22_42, %c0_43] : memref<31x16xf32, #tpu.memory_space<vmem>>, vector<1x16xf32>
    %c23 = arith.constant 23 : index
    %c0_44 = arith.constant 0 : index
    %34 = vector.load %arg3[%c23, %c0_44] : memref<31x16xf32, #tpu.memory_space<vmem>>, vector<1x16xf32>
    %c24_45 = arith.constant 24 : index
    %c0_46 = arith.constant 0 : index
    %35 = vector.load %arg3[%c24_45, %c0_46] : memref<31x16xf32, #tpu.memory_space<vmem>>, vector<1x16xf32>
    %c25 = arith.constant 25 : index
    %c0_47 = arith.constant 0 : index
    %36 = vector.load %arg3[%c25, %c0_47] : memref<31x16xf32, #tpu.memory_space<vmem>>, vector<1x16xf32>
    %c26 = arith.constant 26 : index
    %c0_48 = arith.constant 0 : index
    %37 = vector.load %arg3[%c26, %c0_48] : memref<31x16xf32, #tpu.memory_space<vmem>>, vector<1x16xf32>
    %c27 = arith.constant 27 : index
    %c0_49 = arith.constant 0 : index
    %38 = vector.load %arg3[%c27, %c0_49] : memref<31x16xf32, #tpu.memory_space<vmem>>, vector<1x16xf32>
    %c28 = arith.constant 28 : index
    %c0_50 = arith.constant 0 : index
    %39 = vector.load %arg3[%c28, %c0_50] : memref<31x16xf32, #tpu.memory_space<vmem>>, vector<1x16xf32>
    %c29 = arith.constant 29 : index
    %c0_51 = arith.constant 0 : index
    %40 = vector.load %arg3[%c29, %c0_51] : memref<31x16xf32, #tpu.memory_space<vmem>>, vector<1x16xf32>
    %c30 = arith.constant 30 : index
    %c0_52 = arith.constant 0 : index
    %41 = vector.load %arg3[%c30, %c0_52] : memref<31x16xf32, #tpu.memory_space<vmem>>, vector<1x16xf32>
    %c0_53 = arith.constant 0 : index
    %c0_54 = arith.constant 0 : index
    %42 = vector.load %arg4[%c0_53, %c0_54] : memref<1x16xf32, #tpu.memory_space<vmem>>, vector<1x16xf32>
    %c0_i32 = arith.constant 0 : i32
    %c16_i32 = arith.constant 16 : i32
    %43 = arith.addi %c0_i32, %c16_i32 : i32
    %c1_i32 = arith.constant 1 : i32
    scf.for %arg7 = %c0_i32 to %43 step %c1_i32  : i32 {
      %c6_i32 = arith.constant 6 : i32
      %44 = arith.addi %arg7, %c6_i32 : i32
      %c0_i32_56 = arith.constant 0 : i32
      %45 = arith.addi %44, %c0_i32_56 : i32
      %46 = arith.index_cast %45 : i32 to index
      %c8_57 = arith.constant 8 : index
      %c0_58 = arith.constant 0 : index
      %47 = vector.load %arg6[%46, %c8_57, %c0_58] : memref<28x32x16xf32, #tpu.memory_space<vmem>>, vector<1x16x16xf32>
      %48 = vector.shape_cast %11 : vector<1x16xf32> to vector<1x1x16xf32>
      %49 = vector.broadcast %48 : vector<1x1x16xf32> to vector<1x16x16xf32>
      %50 = arith.mulf %49, %47 : vector<1x16x16xf32>
      %51 = vector.shape_cast %42 : vector<1x16xf32> to vector<1x1x16xf32>
      %52 = vector.broadcast %51 : vector<1x1x16xf32> to vector<1x16x16xf32>
      %53 = arith.addf %50, %52 : vector<1x16x16xf32>
      %c6_i32_59 = arith.constant 6 : i32
      %54 = arith.addi %arg7, %c6_i32_59 : i32
      %c-1_i32 = arith.constant -1 : i32
      %55 = arith.addi %54, %c-1_i32 : i32
      %56 = arith.index_cast %55 : i32 to index
      %c7_60 = arith.constant 7 : index
      %c0_61 = arith.constant 0 : index
      %57 = vector.load %arg6[%56, %c7_60, %c0_61] : memref<28x32x16xf32, #tpu.memory_space<vmem>>, vector<1x16x16xf32>
      %58 = vector.shape_cast %12 : vector<1x16xf32> to vector<1x1x16xf32>
      %59 = vector.broadcast %58 : vector<1x1x16xf32> to vector<1x16x16xf32>
      %60 = arith.mulf %59, %57 : vector<1x16x16xf32>
      %61 = arith.addf %53, %60 : vector<1x16x16xf32>
      %c6_i32_62 = arith.constant 6 : i32
      %62 = arith.addi %arg7, %c6_i32_62 : i32
      %c-1_i32_63 = arith.constant -1 : i32
      %63 = arith.addi %62, %c-1_i32_63 : i32
      %64 = arith.index_cast %63 : i32 to index
      %c8_64 = arith.constant 8 : index
      %c0_65 = arith.constant 0 : index
      %65 = vector.load %arg6[%64, %c8_64, %c0_65] : memref<28x32x16xf32, #tpu.memory_space<vmem>>, vector<1x16x16xf32>
      %66 = vector.shape_cast %13 : vector<1x16xf32> to vector<1x1x16xf32>
      %67 = vector.broadcast %66 : vector<1x1x16xf32> to vector<1x16x16xf32>
      %68 = arith.mulf %67, %65 : vector<1x16x16xf32>
      %69 = arith.addf %61, %68 : vector<1x16x16xf32>
      %c6_i32_66 = arith.constant 6 : i32
      %70 = arith.addi %arg7, %c6_i32_66 : i32
      %c-1_i32_67 = arith.constant -1 : i32
      %71 = arith.addi %70, %c-1_i32_67 : i32
      %72 = arith.index_cast %71 : i32 to index
      %c9_68 = arith.constant 9 : index
      %c0_69 = arith.constant 0 : index
      %73 = vector.load %arg6[%72, %c9_68, %c0_69] : memref<28x32x16xf32, #tpu.memory_space<vmem>>, vector<1x16x16xf32>
      %74 = vector.shape_cast %14 : vector<1x16xf32> to vector<1x1x16xf32>
      %75 = vector.broadcast %74 : vector<1x1x16xf32> to vector<1x16x16xf32>
      %76 = arith.mulf %75, %73 : vector<1x16x16xf32>
      %77 = arith.addf %69, %76 : vector<1x16x16xf32>
      %c6_i32_70 = arith.constant 6 : i32
      %78 = arith.addi %arg7, %c6_i32_70 : i32
      %c0_i32_71 = arith.constant 0 : i32
      %79 = arith.addi %78, %c0_i32_71 : i32
      %80 = arith.index_cast %79 : i32 to index
      %c7_72 = arith.constant 7 : index
      %c0_73 = arith.constant 0 : index
      %81 = vector.load %arg6[%80, %c7_72, %c0_73] : memref<28x32x16xf32, #tpu.memory_space<vmem>>, vector<1x16x16xf32>
      %82 = vector.shape_cast %15 : vector<1x16xf32> to vector<1x1x16xf32>
      %83 = vector.broadcast %82 : vector<1x1x16xf32> to vector<1x16x16xf32>
      %84 = arith.mulf %83, %81 : vector<1x16x16xf32>
      %85 = arith.addf %77, %84 : vector<1x16x16xf32>
      %c6_i32_74 = arith.constant 6 : i32
      %86 = arith.addi %arg7, %c6_i32_74 : i32
      %c0_i32_75 = arith.constant 0 : i32
      %87 = arith.addi %86, %c0_i32_75 : i32
      %88 = arith.index_cast %87 : i32 to index
      %c9_76 = arith.constant 9 : index
      %c0_77 = arith.constant 0 : index
      %89 = vector.load %arg6[%88, %c9_76, %c0_77] : memref<28x32x16xf32, #tpu.memory_space<vmem>>, vector<1x16x16xf32>
      %90 = vector.shape_cast %16 : vector<1x16xf32> to vector<1x1x16xf32>
      %91 = vector.broadcast %90 : vector<1x1x16xf32> to vector<1x16x16xf32>
      %92 = arith.mulf %91, %89 : vector<1x16x16xf32>
      %93 = arith.addf %85, %92 : vector<1x16x16xf32>
      %c6_i32_78 = arith.constant 6 : i32
      %94 = arith.addi %arg7, %c6_i32_78 : i32
      %c1_i32_79 = arith.constant 1 : i32
      %95 = arith.addi %94, %c1_i32_79 : i32
      %96 = arith.index_cast %95 : i32 to index
      %c7_80 = arith.constant 7 : index
      %c0_81 = arith.constant 0 : index
      %97 = vector.load %arg6[%96, %c7_80, %c0_81] : memref<28x32x16xf32, #tpu.memory_space<vmem>>, vector<1x16x16xf32>
      %98 = vector.shape_cast %17 : vector<1x16xf32> to vector<1x1x16xf32>
      %99 = vector.broadcast %98 : vector<1x1x16xf32> to vector<1x16x16xf32>
      %100 = arith.mulf %99, %97 : vector<1x16x16xf32>
      %101 = arith.addf %93, %100 : vector<1x16x16xf32>
      %c6_i32_82 = arith.constant 6 : i32
      %102 = arith.addi %arg7, %c6_i32_82 : i32
      %c1_i32_83 = arith.constant 1 : i32
      %103 = arith.addi %102, %c1_i32_83 : i32
      %104 = arith.index_cast %103 : i32 to index
      %c8_84 = arith.constant 8 : index
      %c0_85 = arith.constant 0 : index
      %105 = vector.load %arg6[%104, %c8_84, %c0_85] : memref<28x32x16xf32, #tpu.memory_space<vmem>>, vector<1x16x16xf32>
      %106 = vector.shape_cast %18 : vector<1x16xf32> to vector<1x1x16xf32>
      %107 = vector.broadcast %106 : vector<1x1x16xf32> to vector<1x16x16xf32>
      %108 = arith.mulf %107, %105 : vector<1x16x16xf32>
      %109 = arith.addf %101, %108 : vector<1x16x16xf32>
      %c6_i32_86 = arith.constant 6 : i32
      %110 = arith.addi %arg7, %c6_i32_86 : i32
      %c1_i32_87 = arith.constant 1 : i32
      %111 = arith.addi %110, %c1_i32_87 : i32
      %112 = arith.index_cast %111 : i32 to index
      %c9_88 = arith.constant 9 : index
      %c0_89 = arith.constant 0 : index
      %113 = vector.load %arg6[%112, %c9_88, %c0_89] : memref<28x32x16xf32, #tpu.memory_space<vmem>>, vector<1x16x16xf32>
      %114 = vector.shape_cast %19 : vector<1x16xf32> to vector<1x1x16xf32>
      %115 = vector.broadcast %114 : vector<1x1x16xf32> to vector<1x16x16xf32>
      %116 = arith.mulf %115, %113 : vector<1x16x16xf32>
      %117 = arith.addf %109, %116 : vector<1x16x16xf32>
      %c6_i32_90 = arith.constant 6 : i32
      %118 = arith.addi %arg7, %c6_i32_90 : i32
      %c0_i32_91 = arith.constant 0 : i32
      %119 = arith.addi %118, %c0_i32_91 : i32
      %120 = arith.index_cast %119 : i32 to index
      %c1_92 = arith.constant 1 : index
      %c0_93 = arith.constant 0 : index
      %121 = vector.load %arg6[%120, %c1_92, %c0_93] : memref<28x32x16xf32, #tpu.memory_space<vmem>>, vector<1x16x16xf32>
      %122 = vector.shape_cast %20 : vector<1x16xf32> to vector<1x1x16xf32>
      %123 = vector.broadcast %122 : vector<1x1x16xf32> to vector<1x16x16xf32>
      %124 = arith.mulf %123, %121 : vector<1x16x16xf32>
      %125 = arith.addf %117, %124 : vector<1x16x16xf32>
      %c6_i32_94 = arith.constant 6 : i32
      %126 = arith.addi %arg7, %c6_i32_94 : i32
      %c0_i32_95 = arith.constant 0 : i32
      %127 = arith.addi %126, %c0_i32_95 : i32
      %128 = arith.index_cast %127 : i32 to index
      %c2_96 = arith.constant 2 : index
      %c0_97 = arith.constant 0 : index
      %129 = vector.load %arg6[%128, %c2_96, %c0_97] : memref<28x32x16xf32, #tpu.memory_space<vmem>>, vector<1x16x16xf32>
      %130 = vector.shape_cast %21 : vector<1x16xf32> to vector<1x1x16xf32>
      %131 = vector.broadcast %130 : vector<1x1x16xf32> to vector<1x16x16xf32>
      %132 = arith.mulf %131, %129 : vector<1x16x16xf32>
      %133 = arith.addf %125, %132 : vector<1x16x16xf32>
      %c6_i32_98 = arith.constant 6 : i32
      %134 = arith.addi %arg7, %c6_i32_98 : i32
      %c0_i32_99 = arith.constant 0 : i32
      %135 = arith.addi %134, %c0_i32_99 : i32
      %136 = arith.index_cast %135 : i32 to index
      %c3_100 = arith.constant 3 : index
      %c0_101 = arith.constant 0 : index
      %137 = vector.load %arg6[%136, %c3_100, %c0_101] : memref<28x32x16xf32, #tpu.memory_space<vmem>>, vector<1x16x16xf32>
      %138 = vector.shape_cast %22 : vector<1x16xf32> to vector<1x1x16xf32>
      %139 = vector.broadcast %138 : vector<1x1x16xf32> to vector<1x16x16xf32>
      %140 = arith.mulf %139, %137 : vector<1x16x16xf32>
      %141 = arith.addf %133, %140 : vector<1x16x16xf32>
      %c6_i32_102 = arith.constant 6 : i32
      %142 = arith.addi %arg7, %c6_i32_102 : i32
      %c0_i32_103 = arith.constant 0 : i32
      %143 = arith.addi %142, %c0_i32_103 : i32
      %144 = arith.index_cast %143 : i32 to index
      %c4_104 = arith.constant 4 : index
      %c0_105 = arith.constant 0 : index
      %145 = vector.load %arg6[%144, %c4_104, %c0_105] : memref<28x32x16xf32, #tpu.memory_space<vmem>>, vector<1x16x16xf32>
      %146 = vector.shape_cast %23 : vector<1x16xf32> to vector<1x1x16xf32>
      %147 = vector.broadcast %146 : vector<1x1x16xf32> to vector<1x16x16xf32>
      %148 = arith.mulf %147, %145 : vector<1x16x16xf32>
      %149 = arith.addf %141, %148 : vector<1x16x16xf32>
      %c6_i32_106 = arith.constant 6 : i32
      %150 = arith.addi %arg7, %c6_i32_106 : i32
      %c0_i32_107 = arith.constant 0 : i32
      %151 = arith.addi %150, %c0_i32_107 : i32
      %152 = arith.index_cast %151 : i32 to index
      %c5_108 = arith.constant 5 : index
      %c0_109 = arith.constant 0 : index
      %153 = vector.load %arg6[%152, %c5_108, %c0_109] : memref<28x32x16xf32, #tpu.memory_space<vmem>>, vector<1x16x16xf32>
      %154 = vector.shape_cast %24 : vector<1x16xf32> to vector<1x1x16xf32>
      %155 = vector.broadcast %154 : vector<1x1x16xf32> to vector<1x16x16xf32>
      %156 = arith.mulf %155, %153 : vector<1x16x16xf32>
      %157 = arith.addf %149, %156 : vector<1x16x16xf32>
      %c6_i32_110 = arith.constant 6 : i32
      %158 = arith.addi %arg7, %c6_i32_110 : i32
      %c0_i32_111 = arith.constant 0 : i32
      %159 = arith.addi %158, %c0_i32_111 : i32
      %160 = arith.index_cast %159 : i32 to index
      %c6_112 = arith.constant 6 : index
      %c0_113 = arith.constant 0 : index
      %161 = vector.load %arg6[%160, %c6_112, %c0_113] : memref<28x32x16xf32, #tpu.memory_space<vmem>>, vector<1x16x16xf32>
      %162 = vector.shape_cast %25 : vector<1x16xf32> to vector<1x1x16xf32>
      %163 = vector.broadcast %162 : vector<1x1x16xf32> to vector<1x16x16xf32>
      %164 = arith.mulf %163, %161 : vector<1x16x16xf32>
      %165 = arith.addf %157, %164 : vector<1x16x16xf32>
      %c6_i32_114 = arith.constant 6 : i32
      %166 = arith.addi %arg7, %c6_i32_114 : i32
      %c0_i32_115 = arith.constant 0 : i32
      %167 = arith.addi %166, %c0_i32_115 : i32
      %168 = arith.index_cast %167 : i32 to index
      %c10_116 = arith.constant 10 : index
      %c0_117 = arith.constant 0 : index
      %169 = vector.load %arg6[%168, %c10_116, %c0_117] : memref<28x32x16xf32, #tpu.memory_space<vmem>>, vector<1x16x16xf32>
      %170 = vector.shape_cast %26 : vector<1x16xf32> to vector<1x1x16xf32>
      %171 = vector.broadcast %170 : vector<1x1x16xf32> to vector<1x16x16xf32>
      %172 = arith.mulf %171, %169 : vector<1x16x16xf32>
      %173 = arith.addf %165, %172 : vector<1x16x16xf32>
      %c6_i32_118 = arith.constant 6 : i32
      %174 = arith.addi %arg7, %c6_i32_118 : i32
      %c0_i32_119 = arith.constant 0 : i32
      %175 = arith.addi %174, %c0_i32_119 : i32
      %176 = arith.index_cast %175 : i32 to index
      %c11_120 = arith.constant 11 : index
      %c0_121 = arith.constant 0 : index
      %177 = vector.load %arg6[%176, %c11_120, %c0_121] : memref<28x32x16xf32, #tpu.memory_space<vmem>>, vector<1x16x16xf32>
      %178 = vector.shape_cast %27 : vector<1x16xf32> to vector<1x1x16xf32>
      %179 = vector.broadcast %178 : vector<1x1x16xf32> to vector<1x16x16xf32>
      %180 = arith.mulf %179, %177 : vector<1x16x16xf32>
      %181 = arith.addf %173, %180 : vector<1x16x16xf32>
      %c6_i32_122 = arith.constant 6 : i32
      %182 = arith.addi %arg7, %c6_i32_122 : i32
      %c0_i32_123 = arith.constant 0 : i32
      %183 = arith.addi %182, %c0_i32_123 : i32
      %184 = arith.index_cast %183 : i32 to index
      %c12_124 = arith.constant 12 : index
      %c0_125 = arith.constant 0 : index
      %185 = vector.load %arg6[%184, %c12_124, %c0_125] : memref<28x32x16xf32, #tpu.memory_space<vmem>>, vector<1x16x16xf32>
      %186 = vector.shape_cast %28 : vector<1x16xf32> to vector<1x1x16xf32>
      %187 = vector.broadcast %186 : vector<1x1x16xf32> to vector<1x16x16xf32>
      %188 = arith.mulf %187, %185 : vector<1x16x16xf32>
      %189 = arith.addf %181, %188 : vector<1x16x16xf32>
      %c6_i32_126 = arith.constant 6 : i32
      %190 = arith.addi %arg7, %c6_i32_126 : i32
      %c0_i32_127 = arith.constant 0 : i32
      %191 = arith.addi %190, %c0_i32_127 : i32
      %192 = arith.index_cast %191 : i32 to index
      %c13_128 = arith.constant 13 : index
      %c0_129 = arith.constant 0 : index
      %193 = vector.load %arg6[%192, %c13_128, %c0_129] : memref<28x32x16xf32, #tpu.memory_space<vmem>>, vector<1x16x16xf32>
      %194 = vector.shape_cast %29 : vector<1x16xf32> to vector<1x1x16xf32>
      %195 = vector.broadcast %194 : vector<1x1x16xf32> to vector<1x16x16xf32>
      %196 = arith.mulf %195, %193 : vector<1x16x16xf32>
      %197 = arith.addf %189, %196 : vector<1x16x16xf32>
      %c6_i32_130 = arith.constant 6 : i32
      %198 = arith.addi %arg7, %c6_i32_130 : i32
      %c0_i32_131 = arith.constant 0 : i32
      %199 = arith.addi %198, %c0_i32_131 : i32
      %200 = arith.index_cast %199 : i32 to index
      %c14_132 = arith.constant 14 : index
      %c0_133 = arith.constant 0 : index
      %201 = vector.load %arg6[%200, %c14_132, %c0_133] : memref<28x32x16xf32, #tpu.memory_space<vmem>>, vector<1x16x16xf32>
      %202 = vector.shape_cast %30 : vector<1x16xf32> to vector<1x1x16xf32>
      %203 = vector.broadcast %202 : vector<1x1x16xf32> to vector<1x16x16xf32>
      %204 = arith.mulf %203, %201 : vector<1x16x16xf32>
      %205 = arith.addf %197, %204 : vector<1x16x16xf32>
      %c6_i32_134 = arith.constant 6 : i32
      %206 = arith.addi %arg7, %c6_i32_134 : i32
      %c0_i32_135 = arith.constant 0 : i32
      %207 = arith.addi %206, %c0_i32_135 : i32
      %208 = arith.index_cast %207 : i32 to index
      %c15_136 = arith.constant 15 : index
      %c0_137 = arith.constant 0 : index
      %209 = vector.load %arg6[%208, %c15_136, %c0_137] : memref<28x32x16xf32, #tpu.memory_space<vmem>>, vector<1x16x16xf32>
      %210 = vector.shape_cast %31 : vector<1x16xf32> to vector<1x1x16xf32>
      %211 = vector.broadcast %210 : vector<1x1x16xf32> to vector<1x16x16xf32>
      %212 = arith.mulf %211, %209 : vector<1x16x16xf32>
      %213 = arith.addf %205, %212 : vector<1x16x16xf32>
      %c6_i32_138 = arith.constant 6 : i32
      %214 = arith.addi %arg7, %c6_i32_138 : i32
      %c-6_i32 = arith.constant -6 : i32
      %215 = arith.addi %214, %c-6_i32 : i32
      %216 = arith.index_cast %215 : i32 to index
      %c8_139 = arith.constant 8 : index
      %c0_140 = arith.constant 0 : index
      %217 = vector.load %arg6[%216, %c8_139, %c0_140] : memref<28x32x16xf32, #tpu.memory_space<vmem>>, vector<1x16x16xf32>
      %218 = vector.shape_cast %32 : vector<1x16xf32> to vector<1x1x16xf32>
      %219 = vector.broadcast %218 : vector<1x1x16xf32> to vector<1x16x16xf32>
      %220 = arith.mulf %219, %217 : vector<1x16x16xf32>
      %221 = arith.addf %213, %220 : vector<1x16x16xf32>
      %c6_i32_141 = arith.constant 6 : i32
      %222 = arith.addi %arg7, %c6_i32_141 : i32
      %c-5_i32 = arith.constant -5 : i32
      %223 = arith.addi %222, %c-5_i32 : i32
      %224 = arith.index_cast %223 : i32 to index
      %c8_142 = arith.constant 8 : index
      %c0_143 = arith.constant 0 : index
      %225 = vector.load %arg6[%224, %c8_142, %c0_143] : memref<28x32x16xf32, #tpu.memory_space<vmem>>, vector<1x16x16xf32>
      %226 = vector.shape_cast %33 : vector<1x16xf32> to vector<1x1x16xf32>
      %227 = vector.broadcast %226 : vector<1x1x16xf32> to vector<1x16x16xf32>
      %228 = arith.mulf %227, %225 : vector<1x16x16xf32>
      %229 = arith.addf %221, %228 : vector<1x16x16xf32>
      %c6_i32_144 = arith.constant 6 : i32
      %230 = arith.addi %arg7, %c6_i32_144 : i32
      %c-4_i32 = arith.constant -4 : i32
      %231 = arith.addi %230, %c-4_i32 : i32
      %232 = arith.index_cast %231 : i32 to index
      %c8_145 = arith.constant 8 : index
      %c0_146 = arith.constant 0 : index
      %233 = vector.load %arg6[%232, %c8_145, %c0_146] : memref<28x32x16xf32, #tpu.memory_space<vmem>>, vector<1x16x16xf32>
      %234 = vector.shape_cast %34 : vector<1x16xf32> to vector<1x1x16xf32>
      %235 = vector.broadcast %234 : vector<1x1x16xf32> to vector<1x16x16xf32>
      %236 = arith.mulf %235, %233 : vector<1x16x16xf32>
      %237 = arith.addf %229, %236 : vector<1x16x16xf32>
      %c6_i32_147 = arith.constant 6 : i32
      %238 = arith.addi %arg7, %c6_i32_147 : i32
      %c-3_i32 = arith.constant -3 : i32
      %239 = arith.addi %238, %c-3_i32 : i32
      %240 = arith.index_cast %239 : i32 to index
      %c8_148 = arith.constant 8 : index
      %c0_149 = arith.constant 0 : index
      %241 = vector.load %arg6[%240, %c8_148, %c0_149] : memref<28x32x16xf32, #tpu.memory_space<vmem>>, vector<1x16x16xf32>
      %242 = vector.shape_cast %35 : vector<1x16xf32> to vector<1x1x16xf32>
      %243 = vector.broadcast %242 : vector<1x1x16xf32> to vector<1x16x16xf32>
      %244 = arith.mulf %243, %241 : vector<1x16x16xf32>
      %245 = arith.addf %237, %244 : vector<1x16x16xf32>
      %c6_i32_150 = arith.constant 6 : i32
      %246 = arith.addi %arg7, %c6_i32_150 : i32
      %c-2_i32 = arith.constant -2 : i32
      %247 = arith.addi %246, %c-2_i32 : i32
      %248 = arith.index_cast %247 : i32 to index
      %c8_151 = arith.constant 8 : index
      %c0_152 = arith.constant 0 : index
      %249 = vector.load %arg6[%248, %c8_151, %c0_152] : memref<28x32x16xf32, #tpu.memory_space<vmem>>, vector<1x16x16xf32>
      %250 = vector.shape_cast %36 : vector<1x16xf32> to vector<1x1x16xf32>
      %251 = vector.broadcast %250 : vector<1x1x16xf32> to vector<1x16x16xf32>
      %252 = arith.mulf %251, %249 : vector<1x16x16xf32>
      %253 = arith.addf %245, %252 : vector<1x16x16xf32>
      %c6_i32_153 = arith.constant 6 : i32
      %254 = arith.addi %arg7, %c6_i32_153 : i32
      %c2_i32 = arith.constant 2 : i32
      %255 = arith.addi %254, %c2_i32 : i32
      %256 = arith.index_cast %255 : i32 to index
      %c8_154 = arith.constant 8 : index
      %c0_155 = arith.constant 0 : index
      %257 = vector.load %arg6[%256, %c8_154, %c0_155] : memref<28x32x16xf32, #tpu.memory_space<vmem>>, vector<1x16x16xf32>
      %258 = vector.shape_cast %37 : vector<1x16xf32> to vector<1x1x16xf32>
      %259 = vector.broadcast %258 : vector<1x1x16xf32> to vector<1x16x16xf32>
      %260 = arith.mulf %259, %257 : vector<1x16x16xf32>
      %261 = arith.addf %253, %260 : vector<1x16x16xf32>
      %c6_i32_156 = arith.constant 6 : i32
      %262 = arith.addi %arg7, %c6_i32_156 : i32
      %c3_i32 = arith.constant 3 : i32
      %263 = arith.addi %262, %c3_i32 : i32
      %264 = arith.index_cast %263 : i32 to index
      %c8_157 = arith.constant 8 : index
      %c0_158 = arith.constant 0 : index
      %265 = vector.load %arg6[%264, %c8_157, %c0_158] : memref<28x32x16xf32, #tpu.memory_space<vmem>>, vector<1x16x16xf32>
      %266 = vector.shape_cast %38 : vector<1x16xf32> to vector<1x1x16xf32>
      %267 = vector.broadcast %266 : vector<1x1x16xf32> to vector<1x16x16xf32>
      %268 = arith.mulf %267, %265 : vector<1x16x16xf32>
      %269 = arith.addf %261, %268 : vector<1x16x16xf32>
      %c6_i32_159 = arith.constant 6 : i32
      %270 = arith.addi %arg7, %c6_i32_159 : i32
      %c4_i32 = arith.constant 4 : i32
      %271 = arith.addi %270, %c4_i32 : i32
      %272 = arith.index_cast %271 : i32 to index
      %c8_160 = arith.constant 8 : index
      %c0_161 = arith.constant 0 : index
      %273 = vector.load %arg6[%272, %c8_160, %c0_161] : memref<28x32x16xf32, #tpu.memory_space<vmem>>, vector<1x16x16xf32>
      %274 = vector.shape_cast %39 : vector<1x16xf32> to vector<1x1x16xf32>
      %275 = vector.broadcast %274 : vector<1x1x16xf32> to vector<1x16x16xf32>
      %276 = arith.mulf %275, %273 : vector<1x16x16xf32>
      %277 = arith.addf %269, %276 : vector<1x16x16xf32>
      %c6_i32_162 = arith.constant 6 : i32
      %278 = arith.addi %arg7, %c6_i32_162 : i32
      %c5_i32 = arith.constant 5 : i32
      %279 = arith.addi %278, %c5_i32 : i32
      %280 = arith.index_cast %279 : i32 to index
      %c8_163 = arith.constant 8 : index
      %c0_164 = arith.constant 0 : index
      %281 = vector.load %arg6[%280, %c8_163, %c0_164] : memref<28x32x16xf32, #tpu.memory_space<vmem>>, vector<1x16x16xf32>
      %282 = vector.shape_cast %40 : vector<1x16xf32> to vector<1x1x16xf32>
      %283 = vector.broadcast %282 : vector<1x1x16xf32> to vector<1x16x16xf32>
      %284 = arith.mulf %283, %281 : vector<1x16x16xf32>
      %285 = arith.addf %277, %284 : vector<1x16x16xf32>
      %c6_i32_165 = arith.constant 6 : i32
      %286 = arith.addi %arg7, %c6_i32_165 : i32
      %c6_i32_166 = arith.constant 6 : i32
      %287 = arith.addi %286, %c6_i32_166 : i32
      %288 = arith.index_cast %287 : i32 to index
      %c8_167 = arith.constant 8 : index
      %c0_168 = arith.constant 0 : index
      %289 = vector.load %arg6[%288, %c8_167, %c0_168] : memref<28x32x16xf32, #tpu.memory_space<vmem>>, vector<1x16x16xf32>
      %290 = vector.shape_cast %41 : vector<1x16xf32> to vector<1x1x16xf32>
      %291 = vector.broadcast %290 : vector<1x1x16xf32> to vector<1x16x16xf32>
      %292 = arith.mulf %291, %289 : vector<1x16x16xf32>
      %293 = arith.addf %285, %292 : vector<1x16x16xf32>
      %c0_169 = arith.constant 0 : index
      %294 = arith.index_cast %arg7 : i32 to index
      %c0_170 = arith.constant 0 : index
      %c0_171 = arith.constant 0 : index
      %295 = vector.load %arg5[%c0_169, %294, %c0_170, %c0_171] : memref<1x16x16x16xf32, #tpu.memory_space<vmem>>, vector<1x1x16x16xf32>
      %296 = vector.shape_cast %295 : vector<1x1x16x16xf32> to vector<1x16x16xf32>
      %297 = vector.shape_cast %293 : vector<1x16x16xf32> to vector<1x1x16x16xf32>
      tpu.vector_store %arg5[%c0_169, %294, %c0_170, %c0_171], %297 {strides = array<i32>} : memref<1x16x16x16xf32, #tpu.memory_space<vmem>>, vector<1x1x16x16xf32>,
    }
    %c16_i32_55 = arith.constant 16 : i32
    return
  }
  func.func @transform_0(%arg0: i32, %arg1: i32) -> (i32, i32, i32, i32) {
    %c0_i32 = arith.constant 0 : i32
    %c0_i32_0 = arith.constant 0 : i32
    %c0_i32_1 = arith.constant 0 : i32
    return %arg0, %c0_i32, %c0_i32_0, %arg1 : i32, i32, i32, i32
  }
  func.func @transform_1(%arg0: i32, %arg1: i32) -> (i32, i32) {
    %c0_i32 = arith.constant 0 : i32
    %c0_i32_0 = arith.constant 0 : i32
    return %c0_i32, %arg1 : i32, i32
  }
  func.func @transform_2(%arg0: i32, %arg1: i32) -> (i32, i32) {
    %c0_i32 = arith.constant 0 : i32
    %c0_i32_0 = arith.constant 0 : i32
    return %c0_i32, %arg1 : i32, i32
  }
  func.func @transform_3(%arg0: i32, %arg1: i32) -> (i32, i32, i32, i32) {
    %c0_i32 = arith.constant 0 : i32
    %c0_i32_0 = arith.constant 0 : i32
    %c0_i32_1 = arith.constant 0 : i32
    return %arg0, %c0_i32, %c0_i32_0, %arg1 : i32, i32, i32, i32
  }
}

</mosaic_0001>

<llo_original>
// kernel: tpu_custom_call.1
$region0: #{tpu_custom_call.1}
  #allocation0 [shape = 'u32[]', space=smem, size = 0x4, offset = 0x4, fixed_abs, tag = 'smem constant byte address 0x4 - core index']
  #allocation1 [shape = 'u32[144,128]{1,0:T(1,128)}', space=vmem, size = 0x12000, scoped, tag = 'internal scratch']
  #allocation2 [shape = 'f32[28,32,16]{2,1,0:T(8,128)}', space=vmem, size = 0x70000, scoped, tag = 'scratch operand']
  %s0 = inlined_call_operand.hbm [shape: f32[2,16,16,16], index: 0, kind: input, shape index: {}]
  %s1 = inlined_call_operand.vmem [shape: f32[31,16], index: 1, kind: input, shape index: {}]
  %s2 = inlined_call_operand.vmem [shape: f32[1,16], index: 2, kind: input, shape index: {}]
  %s3 = inlined_call_operand.hbm [shape: f32[2,16,16,16], index: 3, kind: output, shape index: {}]
  %s4 = sld [smem:[#allocation0]]
  $region56: #{tpu_custom_call.1} parent=0
    _
  %s6 = ssub.s32 1, %s4
  %s7 = scalar_select 0, %s6, %s4
  $region1: #{tpu_custom_call.1} parent=0
    #allocation3 [shape = 'u8[262144]{0}', space=vmem, size = 0x40000, scoped, tag = 'input window, operand 0']
    #allocation4 [shape = 's32[2]{0}', space=sflag, size = 0x8, scoped, tag = 'scoped memory for tpu_custom_call.1']
    #allocation5 [shape = 's32[2]{0}', space=sflag, size = 0x8, scoped, tag = 'scoped memory for tpu_custom_call.1']
    #allocation6 [shape = 'u8[262144]{0}', space=vmem, size = 0x40000, scoped, tag = 'output window, operand 0']
    %8 = vsyncpa [#allocation4], 0
    %s9 = scalar_lea.sflag [#allocation4], 1
    %10 = vsyncpa %s9, 0
    %11 = vsyncpa [#allocation5], 0
    %s12 = scalar_lea.sflag [#allocation5], 1
    %13 = vsyncpa %s12, 0
    loop: start=0, step=1, limit=4
    $region2: #{tpu_custom_call.1} parent=1 // loop_pre_header
      _
    $region3: #{tpu_custom_call.1} parent=1 // loop_header
      %s15 = sphi 0, %s19
      %p16 = scmp.ge.s32.totalorder %s15, 4
      %s22 = sphi 0, %s34
      %s23 = sphi 0, %s30
      %s24 = sphi 0, %s22
      %s25 = sphi 0, %s23
      %s26 = sphi 0, %s24
      %s27 = sphi 0, %s25
      %s39 = sphi 0, %s41
      %s42 = sphi 0, %s39
      %s43 = sphi 0, %s42
      %s59 = sphi 0, %s43
      %s65 = sphi 0, %s67
      %s68 = sphi 0, %s65
      %s69 = sphi 0, %s68
      %s85 = sphi 0, %s69
      %s91 = sphi 0, %s93
      %s94 = sphi 0, %s91
      %s95 = sphi 0, %s94
      %s111 = sphi 0, %s95
      %s119 = sphi 0, %s121
      %s122 = sphi 0, %s119
      %s123 = sphi 0, %s122
      %s139 = sphi 0, %s123
    $region4: #{tpu_custom_call.1} parent=1 // loop_header_branch
      %18 = sbr.rel (%p16) target = $region8
    $region5: #{tpu_custom_call.1} parent=1 // loop_body
      %s20 = ssub.s32 %s15, 1
      %s21 = ssub.s32 %s15, 2
      %s28 = sadd.s32 1, %s23
      %p29 = scmp.ge.s32.totalorder %s28, 1
      %s30 = scalar_select %p29, 0, %s28
      %s31 = sadd.s32 1, %s22
      %s32 = scalar_select %p29, %s31, %s22
      %p33 = scmp.ge.s32.totalorder %s32, 2
      %s34 = scalar_select %p33, 0, %s32
      %s35 = ssub.s32 %s22, %s34
      %s36 = ssub.s32 %s23, %s30
      %s37 = sor.u32 %s35, %s36
      %p38 = scmp.eq.s32.totalorder %s37, 0
      %s40 = sadd.s32 %s39, 1
      %s41 = scalar_select %p38, %s39, %s40
      %p44 = pneg %p38
      %p45 = scmp.eq.s32.totalorder %s15, 1
      %p46 = por %p44, %p45
      %p47 = scmp.ne.s32.totalorder %s39, %s42
      %p48 = scmp.eq.s32.totalorder %s15, 0
      %p49 = por %p47, %p48
      %p50 = scmp.ne.s32.totalorder %s39, %s42
      %p51 = scmp.eq.s32.totalorder %s20, 1
      %p52 = por %p50, %p51
      %p53 = scmp.ne.s32.totalorder %s42, %s43
      %p54 = scmp.eq.s32.totalorder %s20, 0
      %p55 = por %p53, %p54
      %p56 = scmp.ne.s32.totalorder %s42, %s43
      %p57 = scmp.eq.s32.totalorder %s21, 1
      %p58 = por %p56, %p57
      %p60 = scmp.ne.s32.totalorder %s43, %s59
      %p61 = scmp.eq.s32.totalorder %s21, 0
      %p62 = por %p60, %p61
      %s63 = ssub.s32 %s23, %s30
      %p64 = scmp.eq.s32.totalorder %s63, 0
      %s66 = sadd.s32 %s65, 1
      %s67 = scalar_select %p64, %s65, %s66
      %p70 = pneg %p64
      %p71 = scmp.eq.s32.totalorder %s15, 1
      %p72 = por %p70, %p71
      %p73 = scmp.ne.s32.totalorder %s65, %s68
      %p74 = scmp.eq.s32.totalorder %s15, 0
      %p75 = por %p73, %p74
      %p76 = scmp.ne.s32.totalorder %s65, %s68
      %p77 = scmp.eq.s32.totalorder %s20, 1
      %p78 = por %p76, %p77
      %p79 = scmp.ne.s32.totalorder %s68, %s69
      %p80 = scmp.eq.s32.totalorder %s20, 0
      %p81 = por %p79, %p80
      %p82 = scmp.ne.s32.totalorder %s68, %s69
      %p83 = scmp.eq.s32.totalorder %s21, 1
      %p84 = por %p82, %p83
      %p86 = scmp.ne.s32.totalorder %s69, %s85
      %p87 = scmp.eq.s32.totalorder %s21, 0
      %p88 = por %p86, %p87
      %s89 = ssub.s32 %s23, %s30
      %p90 = scmp.eq.s32.totalorder %s89, 0
      %s92 = sadd.s32 %s91, 1
      %s93 = scalar_select %p90, %s91, %s92
      %p96 = pneg %p90
      %p97 = scmp.eq.s32.totalorder %s15, 1
      %p98 = por %p96, %p97
      %p99 = scmp.ne.s32.totalorder %s91, %s94
      %p100 = scmp.eq.s32.totalorder %s15, 0
      %p101 = por %p99, %p100
      %p102 = scmp.ne.s32.totalorder %s91, %s94
      %p103 = scmp.eq.s32.totalorder %s20, 1
      %p104 = por %p102, %p103
      %p105 = scmp.ne.s32.totalorder %s94, %s95
      %p106 = scmp.eq.s32.totalorder %s20, 0
      %p107 = por %p105, %p106
      %p108 = scmp.ne.s32.totalorder %s94, %s95
      %p109 = scmp.eq.s32.totalorder %s21, 1
      %p110 = por %p108, %p109
      %p112 = scmp.ne.s32.totalorder %s95, %s111
      %p113 = scmp.eq.s32.totalorder %s21, 0
      %p114 = por %p112, %p113
      %s115 = ssub.s32 %s22, %s34
      %s116 = ssub.s32 %s23, %s30
      %s117 = sor.u32 %s115, %s116
      %p118 = scmp.eq.s32.totalorder %s117, 0
      %s120 = sadd.s32 %s119, 1
      %s121 = scalar_select %p118, %s119, %s120
      %p124 = pneg %p118
      %p125 = scmp.eq.s32.totalorder %s15, 1
      %p126 = por %p124, %p125
      %p127 = scmp.ne.s32.totalorder %s119, %s122
      %p128 = scmp.eq.s32.totalorder %s15, 0
      %p129 = por %p127, %p128
      %p130 = scmp.ne.s32.totalorder %s119, %s122
      %p131 = scmp.eq.s32.totalorder %s20, 1
      %p132 = por %p130, %p131
      %p133 = scmp.ne.s32.totalorder %s122, %s123
      %p134 = scmp.eq.s32.totalorder %s20, 0
      %p135 = por %p133, %p134
      %p136 = scmp.ne.s32.totalorder %s122, %s123
      %p137 = scmp.eq.s32.totalorder %s21, 1
      %p138 = por %p136, %p137
      %p140 = scmp.ne.s32.totalorder %s123, %s139
      %p141 = scmp.eq.s32.totalorder %s21, 0
      %p142 = por %p140, %p141
      %p143 = scmp.le.s32.totalorder 1, %s15
      %p144 = scmp.lt.s32.totalorder %s15, 3
      %p145 = pnand %p143, %p144
      %p146 = pneg %p145
      // Predicated region
      $region9: #{tpu_custom_call.1} parent=5 // pred_check
        _
      $region10: #{tpu_custom_call.1} parent=5 // pred_check_branch
        %148 = sbr.rel (%p145) target = $region12
      $region11: #{tpu_custom_call.1} parent=5 // pred_region
        %s149 = ssub.s32 %s15, 1
        // Predicated region
        $region13: #{tpu_custom_call.1} parent=11 // pred_check
          %p150 = pneg %p81
        $region14: #{tpu_custom_call.1} parent=11 // pred_check_branch
          %152 = sbr.rel (%p150) target = $region16
        $region15: #{tpu_custom_call.1} parent=11 // pred_region
          %p153 = scmp.lt.s32.totalorder %s25, 0
          %s154 = scalar_select %p153, %s25, 0
          %s155 = smul.addr %s154, 8
          %s156 = scalar_lea.vmem %s1, %s155
        $region16: #{tpu_custom_call.1} parent=11 // pred_fallthru
          _
        // Predicated region
        $region17: #{tpu_custom_call.1} parent=11 // pred_check
          %p157 = pneg %p107
        $region18: #{tpu_custom_call.1} parent=11 // pred_check_branch
          %159 = sbr.rel (%p157) target = $region20
        $region19: #{tpu_custom_call.1} parent=11 // pred_region
          %p160 = scmp.lt.s32.totalorder %s25, 0
          %s161 = scalar_select %p160, %s25, 0
          %s162 = scalar_lea.vmem %s2, %s161
        $region20: #{tpu_custom_call.1} parent=11 // pred_fallthru
          _
      $region12: #{tpu_custom_call.1} parent=5 // pred_fallthru
        _
      %p163 = scmp.lt.s32.totalorder %s15, 2
      // Predicated region
      $region21: #{tpu_custom_call.1} parent=5 // pred_check
        %p164 = pneg %p163
      $region22: #{tpu_custom_call.1} parent=5 // pred_check_branch
        %166 = sbr.rel (%p164) target = $region24
      $region23: #{tpu_custom_call.1} parent=5 // pred_region
        // Predicated region
        $region25: #{tpu_custom_call.1} parent=23 // pred_check
          %p167 = pneg %p49
        $region26: #{tpu_custom_call.1} parent=23 // pred_check_branch
          %169 = sbr.rel (%p167) target = $region28
        $region27: #{tpu_custom_call.1} parent=23 // pred_region
          %s170 = sand.u32 %s39, 1
          %s171 = scalar_lea.sflag [#allocation4], %s170
          %s172 = sand.u32 %s39, 1
          %s173 = smul.addr %s172, 256
          %s174 = scalar_lea.vmem [#allocation3], %s173
          %s176 = ssub.s32 4096, 4096
          %177 = vsyncadd %s171, %s176
          %s178 = smul.addr %s22, 32
          %s179 = sadd.s32 %s23, %s178
          %s180 = smul.addr %s179, 128
          %s181 = scalar_lea.hbm %s0, %s180
          %s182 = sshll.u32 %s174, 4
          %s183 = int_to_ptr.vmem [resolvable:$true] %s182
          %188 = dma.hbm_to_vmem [thread:$0]  %s181, 4096, %s183, %s171, 128, 128, 8
        $region28: #{tpu_custom_call.1} parent=23 // pred_fallthru
          _
      $region24: #{tpu_custom_call.1} parent=5 // pred_fallthru
        _
      %p189 = scmp.le.s32.totalorder 1, %s15
      %p190 = scmp.lt.s32.totalorder %s15, 3
      %p191 = pnand %p189, %p190
      %p192 = pneg %p191
      // Predicated region
      $region29: #{tpu_custom_call.1} parent=5 // pred_check
        _
      $region30: #{tpu_custom_call.1} parent=5 // pred_check_branch
        %194 = sbr.rel (%p191) target = $region32
      $region31: #{tpu_custom_call.1} parent=5 // pred_region
        %s195 = ssub.s32 %s15, 1
        %s196 = sand.u32 %s42, 1
        %s197 = scalar_lea.sflag [#allocation4], %s196
        %s198 = sand.u32 %s42, 1
        %s199 = smul.addr %s198, 256
        %s200 = scalar_lea.vmem [#allocation3], %s199
        // Predicated region
        $region33: #{tpu_custom_call.1} parent=31 // pred_check
          %p201 = pneg %p55
        $region34: #{tpu_custom_call.1} parent=31 // pred_check_branch
          %203 = sbr.rel (%p201) target = $region36
        $region35: #{tpu_custom_call.1} parent=31 // pred_region
          %204 = dma.done %s197, 4096
        $region36: #{tpu_custom_call.1} parent=31 // pred_fallthru
          _
        %s205 = sand.u32 %s42, 1
        %s206 = scalar_lea.sflag [#allocation4], %s205
        %s207 = sand.u32 %s42, 1
        %s208 = smul.addr %s207, 256
        %s209 = scalar_lea.vmem [#allocation3], %s208
        %p210 = pneg %p55
        %p211 = pneg %p52
        %p212 = scmp.lt.s32.totalorder %s25, 0
        %s213 = scalar_select %p212, %s25, 0
        %s214 = smul.addr %s213, 8
        %s215 = scalar_lea.vmem %s1, %s214
        %p216 = pneg %p81
        %p217 = pneg %p78
        %p218 = scmp.lt.s32.totalorder %s25, 0
        %s219 = scalar_select %p218, %s25, 0
        %s220 = scalar_lea.vmem %s2, %s219
        %p221 = pneg %p107
        %p222 = pneg %p104
        %p223 = pneg %p135
        %p224 = pneg %p132
        %s225 = sand.u32 %s122, 1
        %s226 = scalar_lea.sflag [#allocation5], %s225
        %s227 = sand.u32 %s122, 1
        %s228 = smul.addr %s227, 256
        %s229 = scalar_lea.vmem [#allocation6], %s228
        %p230 = scmp.lt.s32.totalorder %s25, 0
        %s231 = scalar_select %p230, %s25, 0
        %s232 = smul.addr %s231, 8
        %s233 = scalar_lea.vmem %s1, %s232
        %p234 = scmp.lt.s32.totalorder %s25, 0
        %s235 = scalar_select %p234, %s25, 0
        %s236 = scalar_lea.vmem %s2, %s235
        %vm237 = vcmask 130048
        %238 = vst.msk [vmem:[#allocation2] sm:$0xff] %vm237, 0.0
        %239 = vst.msk [vmem:[#allocation2 + $0x8] sm:$0xff] %vm237, 0.0
        %240 = vst.msk [vmem:[#allocation2 + $0x10] sm:$0xff] %vm237, 0.0
        %241 = vst.msk [vmem:[#allocation2 + $0x18] sm:$0xff] %vm237, 0.0
        %242 = vst.msk [vmem:[#allocation2 + $0x20] sm:$0xff] %vm237, 0.0
        %243 = vst.msk [vmem:[#allocation2 + $0x28] sm:$0xff] %vm237, 0.0
        %244 = vst.msk [vmem:[#allocation2 + $0x30] sm:$0xff] %vm237, 0.0
        %245 = vst.msk [vmem:[#allocation2 + $0x38] sm:$0xff] %vm237, 0.0
        %246 = vst.msk [vmem:[#allocation2 + $0x40] sm:$0xff] %vm237, 0.0
        %247 = vst.msk [vmem:[#allocation2 + $0x48] sm:$0xff] %vm237, 0.0
        %248 = vst.msk [vmem:[#allocation2 + $0x50] sm:$0xff] %vm237, 0.0
        %249 = vst.msk [vmem:[#allocation2 + $0x58] sm:$0xff] %vm237, 0.0
        %250 = vst.msk [vmem:[#allocation2 + $0x60] sm:$0xff] %vm237, 0.0
        %251 = vst.msk [vmem:[#allocation2 + $0x68] sm:$0xff] %vm237, 0.0
        %252 = vst.msk [vmem:[#allocation2 + $0x70] sm:$0xff] %vm237, 0.0
        %253 = vst.msk [vmem:[#allocation2 + $0x78] sm:$0xff] %vm237, 0.0
        %254 = vst.msk [vmem:[#allocation2 + $0x80] sm:$0xff] %vm237, 0.0
        %255 = vst.msk [vmem:[#allocation2 + $0x88] sm:$0xff] %vm237, 0.0
        %256 = vst.msk [vmem:[#allocation2 + $0x90] sm:$0xff] %vm237, 0.0
        %257 = vst.msk [vmem:[#allocation2 + $0x98] sm:$0xff] %vm237, 0.0
        %258 = vst.msk [vmem:[#allocation2 + $0xa0] sm:$0xff] %vm237, 0.0
        %259 = vst.msk [vmem:[#allocation2 + $0xa8] sm:$0xff] %vm237, 0.0
        %260 = vst.msk [vmem:[#allocation2 + $0xb0] sm:$0xff] %vm237, 0.0
        %261 = vst.msk [vmem:[#allocation2 + $0xb8] sm:$0xff] %vm237, 0.0
        %s262 = scalar_lea.vmem [#allocation2], 704
        %263 = vst.msk [vmem:[%s262] sm:$0xff] %vm237, 0.0
        %264 = vst.msk [vmem:[%s262 + $0x8] sm:$0xff] %vm237, 0.0
        %265 = vst.msk [vmem:[%s262 + $0x10] sm:$0xff] %vm237, 0.0
        %266 = vst.msk [vmem:[%s262 + $0x18] sm:$0xff] %vm237, 0.0
        %267 = vst.msk [vmem:[%s262 + $0x20] sm:$0xff] %vm237, 0.0
        %268 = vst.msk [vmem:[%s262 + $0x28] sm:$0xff] %vm237, 0.0
        %269 = vst.msk [vmem:[%s262 + $0x30] sm:$0xff] %vm237, 0.0
        %270 = vst.msk [vmem:[%s262 + $0x38] sm:$0xff] %vm237, 0.0
        %271 = vst.msk [vmem:[%s262 + $0x40] sm:$0xff] %vm237, 0.0
        %272 = vst.msk [vmem:[%s262 + $0x48] sm:$0xff] %vm237, 0.0
        %273 = vst.msk [vmem:[%s262 + $0x50] sm:$0xff] %vm237, 0.0
        %274 = vst.msk [vmem:[%s262 + $0x58] sm:$0xff] %vm237, 0.0
        %275 = vst.msk [vmem:[%s262 + $0x60] sm:$0xff] %vm237, 0.0
        %276 = vst.msk [vmem:[%s262 + $0x68] sm:$0xff] %vm237, 0.0
        %277 = vst.msk [vmem:[%s262 + $0x70] sm:$0xff] %vm237, 0.0
        %278 = vst.msk [vmem:[%s262 + $0x78] sm:$0xff] %vm237, 0.0
        %279 = vst.msk [vmem:[%s262 + $0x80] sm:$0xff] %vm237, 0.0
        %280 = vst.msk [vmem:[%s262 + $0x88] sm:$0xff] %vm237, 0.0
        %281 = vst.msk [vmem:[%s262 + $0x90] sm:$0xff] %vm237, 0.0
        %282 = vst.msk [vmem:[%s262 + $0x98] sm:$0xff] %vm237, 0.0
        %283 = vst.msk [vmem:[%s262 + $0xa0] sm:$0xff] %vm237, 0.0
        %284 = vst.msk [vmem:[%s262 + $0xa8] sm:$0xff] %vm237, 0.0
        %285 = vst.msk [vmem:[%s262 + $0xb0] sm:$0xff] %vm237, 0.0
        %286 = vst.msk [vmem:[%s262 + $0xb8] sm:$0xff] %vm237, 0.0
        %vm287 = vcmask 129024
        %288 = vst.msk [vmem:[#allocation2 + $0x1] sm:$0x7f] %vm287, 0.0
        %289 = vst.msk [vmem:[#allocation2 + $0x21] sm:$0x7f] %vm287, 0.0
        %290 = vst.msk [vmem:[#allocation2 + $0x41] sm:$0x7f] %vm287, 0.0
        %291 = vst.msk [vmem:[#allocation2 + $0x61] sm:$0x7f] %vm287, 0.0
        %292 = vst.msk [vmem:[#allocation2 + $0x81] sm:$0x7f] %vm287, 0.0
        %293 = vst.msk [vmem:[#allocation2 + $0xa1] sm:$0x7f] %vm287, 0.0
        %294 = vst.msk [vmem:[#allocation2 + $0xc1] sm:$0x7f] %vm287, 0.0
        %295 = vst.msk [vmem:[#allocation2 + $0xe1] sm:$0x7f] %vm287, 0.0
        %296 = vst.msk [vmem:[#allocation2 + $0x101] sm:$0x7f] %vm287, 0.0
        %297 = vst.msk [vmem:[#allocation2 + $0x121] sm:$0x7f] %vm287, 0.0
        %298 = vst.msk [vmem:[#allocation2 + $0x141] sm:$0x7f] %vm287, 0.0
        %299 = vst.msk [vmem:[#allocation2 + $0x161] sm:$0x7f] %vm287, 0.0
        %300 = vst.msk [vmem:[#allocation2 + $0x181] sm:$0x7f] %vm287, 0.0
        %301 = vst.msk [vmem:[#allocation2 + $0x1a1] sm:$0x7f] %vm287, 0.0
        %302 = vst.msk [vmem:[#allocation2 + $0x1c1] sm:$0x7f] %vm287, 0.0
        %303 = vst.msk [vmem:[#allocation2 + $0x1e1] sm:$0x7f] %vm287, 0.0
        %304 = vst.msk [vmem:[#allocation2 + $0x201] sm:$0x7f] %vm287, 0.0
        %305 = vst.msk [vmem:[#allocation2 + $0x221] sm:$0x7f] %vm287, 0.0
        %306 = vst.msk [vmem:[#allocation2 + $0x241] sm:$0x7f] %vm287, 0.0
        %307 = vst.msk [vmem:[#allocation2 + $0x261] sm:$0x7f] %vm287, 0.0
        %308 = vst.msk [vmem:[#allocation2 + $0x281] sm:$0x7f] %vm287, 0.0
        %309 = vst.msk [vmem:[#allocation2 + $0x2a1] sm:$0x7f] %vm287, 0.0
        %310 = vst.msk [vmem:[#allocation2 + $0x2c1] sm:$0x7f] %vm287, 0.0
        %311 = vst.msk [vmem:[#allocation2 + $0x2e1] sm:$0x7f] %vm287, 0.0
        %312 = vst.msk [vmem:[#allocation2 + $0x301] sm:$0x7f] %vm287, 0.0
        %313 = vst.msk [vmem:[#allocation2 + $0x321] sm:$0x7f] %vm287, 0.0
        %314 = vst.msk [vmem:[#allocation2 + $0x341] sm:$0x7f] %vm287, 0.0
        %315 = vst.msk [vmem:[#allocation2 + $0x361] sm:$0x7f] %vm287, 0.0
        %316 = vst.msk [vmem:[#allocation2 + $0x18] sm:$0x7f] %vm287, 0.0
        %317 = vst.msk [vmem:[#allocation2 + $0x38] sm:$0x7f] %vm287, 0.0
        %318 = vst.msk [vmem:[#allocation2 + $0x58] sm:$0x7f] %vm287, 0.0
        %319 = vst.msk [vmem:[#allocation2 + $0x78] sm:$0x7f] %vm287, 0.0
        %320 = vst.msk [vmem:[#allocation2 + $0x98] sm:$0x7f] %vm287, 0.0
        %321 = vst.msk [vmem:[#allocation2 + $0xb8] sm:$0x7f] %vm287, 0.0
        %322 = vst.msk [vmem:[#allocation2 + $0xd8] sm:$0x7f] %vm287, 0.0
        %323 = vst.msk [vmem:[#allocation2 + $0xf8] sm:$0x7f] %vm287, 0.0
        %324 = vst.msk [vmem:[#allocation2 + $0x118] sm:$0x7f] %vm287, 0.0
        %325 = vst.msk [vmem:[#allocation2 + $0x138] sm:$0x7f] %vm287, 0.0
        %326 = vst.msk [vmem:[#allocation2 + $0x158] sm:$0x7f] %vm287, 0.0
        %327 = vst.msk [vmem:[#allocation2 + $0x178] sm:$0x7f] %vm287, 0.0
        %328 = vst.msk [vmem:[#allocation2 + $0x198] sm:$0x7f] %vm287, 0.0
        %329 = vst.msk [vmem:[#allocation2 + $0x1b8] sm:$0x7f] %vm287, 0.0
        %330 = vst.msk [vmem:[#allocation2 + $0x1d8] sm:$0x7f] %vm287, 0.0
        %331 = vst.msk [vmem:[#allocation2 + $0x1f8] sm:$0x7f] %vm287, 0.0
        %332 = vst.msk [vmem:[#allocation2 + $0x218] sm:$0x7f] %vm287, 0.0
        %333 = vst.msk [vmem:[#allocation2 + $0x238] sm:$0x7f] %vm287, 0.0
        %334 = vst.msk [vmem:[#allocation2 + $0x258] sm:$0x7f] %vm287, 0.0
        %335 = vst.msk [vmem:[#allocation2 + $0x278] sm:$0x7f] %vm287, 0.0
        %336 = vst.msk [vmem:[#allocation2 + $0x298] sm:$0x7f] %vm287, 0.0
        %337 = vst.msk [vmem:[#allocation2 + $0x2b8] sm:$0x7f] %vm287, 0.0
        %338 = vst.msk [vmem:[#allocation2 + $0x2d8] sm:$0x7f] %vm287, 0.0
        %339 = vst.msk [vmem:[#allocation2 + $0x2f8] sm:$0x7f] %vm287, 0.0
        %340 = vst.msk [vmem:[#allocation2 + $0x318] sm:$0x7f] %vm287, 0.0
        %341 = vst.msk [vmem:[#allocation2 + $0x338] sm:$0x7f] %vm287, 0.0
        %342 = vst.msk [vmem:[#allocation2 + $0x358] sm:$0x7f] %vm287, 0.0
        %343 = vst.msk [vmem:[#allocation2 + $0x378] sm:$0x7f] %vm287, 0.0
        %v344 = vld [vmem:[%s200] sm:$0xff]
        %v345 = vld [vmem:[%s200 + $0x8] sm:$0xff]
        %v346 = vld [vmem:[%s200 + $0x10] sm:$0xff]
        %v347 = vld [vmem:[%s200 + $0x18] sm:$0xff]
        %v348 = vld [vmem:[%s200 + $0x20] sm:$0xff]
        %v349 = vld [vmem:[%s200 + $0x28] sm:$0xff]
        %v350 = vld [vmem:[%s200 + $0x30] sm:$0xff]
        %v351 = vld [vmem:[%s200 + $0x38] sm:$0xff]
        %v352 = vld [vmem:[%s200 + $0x40] sm:$0xff]
        %v353 = vld [vmem:[%s200 + $0x48] sm:$0xff]
        %v354 = vld [vmem:[%s200 + $0x50] sm:$0xff]
        %v355 = vld [vmem:[%s200 + $0x58] sm:$0xff]
        %v356 = vld [vmem:[%s200 + $0x60] sm:$0xff]
        %v357 = vld [vmem:[%s200 + $0x68] sm:$0xff]
        %v358 = vld [vmem:[%s200 + $0x70] sm:$0xff]
        %v359 = vld [vmem:[%s200 + $0x78] sm:$0xff]
        %v360 = vld [vmem:[%s200 + $0x80] sm:$0xff]
        %v361 = vld [vmem:[%s200 + $0x88] sm:$0xff]
        %v362 = vld [vmem:[%s200 + $0x90] sm:$0xff]
        %v363 = vld [vmem:[%s200 + $0x98] sm:$0xff]
        %v364 = vld [vmem:[%s200 + $0xa0] sm:$0xff]
        %v365 = vld [vmem:[%s200 + $0xa8] sm:$0xff]
        %v366 = vld [vmem:[%s200 + $0xb0] sm:$0xff]
        %v367 = vld [vmem:[%s200 + $0xb8] sm:$0xff]
        %v368 = vld [vmem:[%s200 + $0xc0] sm:$0xff]
        %v369 = vld [vmem:[%s200 + $0xc8] sm:$0xff]
        %v370 = vld [vmem:[%s200 + $0xd0] sm:$0xff]
        %v371 = vld [vmem:[%s200 + $0xd8] sm:$0xff]
        %v372 = vld [vmem:[%s200 + $0xe0] sm:$0xff]
        %v373 = vld [vmem:[%s200 + $0xe8] sm:$0xff]
        %v374 = vld [vmem:[%s200 + $0xf0] sm:$0xff]
        %v375 = vld [vmem:[%s200 + $0xf8] sm:$0xff]
        %s376 = scalar_lea.vmem [#allocation2], 192
        %377 = vst.msk [vmem:[%s376 + $0x8] sm:$0xff] %vm237, %v344
        %378 = vst.msk [vmem:[%s376 + $0x10] sm:$0xff] %vm237, %v345
        %379 = vst.msk [vmem:[%s376 + $0x28] sm:$0xff] %vm237, %v346
        %380 = vst.msk [vmem:[%s376 + $0x30] sm:$0xff] %vm237, %v347
        %381 = vst.msk [vmem:[%s376 + $0x48] sm:$0xff] %vm237, %v348
        %382 = vst.msk [vmem:[%s376 + $0x50] sm:$0xff] %vm237, %v349
        %383 = vst.msk [vmem:[%s376 + $0x68] sm:$0xff] %vm237, %v350
        %384 = vst.msk [vmem:[%s376 + $0x70] sm:$0xff] %vm237, %v351
        %385 = vst.msk [vmem:[%s376 + $0x88] sm:$0xff] %vm237, %v352
        %386 = vst.msk [vmem:[%s376 + $0x90] sm:$0xff] %vm237, %v353
        %387 = vst.msk [vmem:[%s376 + $0xa8] sm:$0xff] %vm237, %v354
        %388 = vst.msk [vmem:[%s376 + $0xb0] sm:$0xff] %vm237, %v355
        %389 = vst.msk [vmem:[%s376 + $0xc8] sm:$0xff] %vm237, %v356
        %390 = vst.msk [vmem:[%s376 + $0xd0] sm:$0xff] %vm237, %v357
        %391 = vst.msk [vmem:[%s376 + $0xe8] sm:$0xff] %vm237, %v358
        %392 = vst.msk [vmem:[%s376 + $0xf0] sm:$0xff] %vm237, %v359
        %393 = vst.msk [vmem:[%s376 + $0x108] sm:$0xff] %vm237, %v360
        %394 = vst.msk [vmem:[%s376 + $0x110] sm:$0xff] %vm237, %v361
        %395 = vst.msk [vmem:[%s376 + $0x128] sm:$0xff] %vm237, %v362
        %396 = vst.msk [vmem:[%s376 + $0x130] sm:$0xff] %vm237, %v363
        %397 = vst.msk [vmem:[%s376 + $0x148] sm:$0xff] %vm237, %v364
        %398 = vst.msk [vmem:[%s376 + $0x150] sm:$0xff] %vm237, %v365
        %399 = vst.msk [vmem:[%s376 + $0x168] sm:$0xff] %vm237, %v366
        %400 = vst.msk [vmem:[%s376 + $0x170] sm:$0xff] %vm237, %v367
        %401 = vst.msk [vmem:[%s376 + $0x188] sm:$0xff] %vm237, %v368
        %402 = vst.msk [vmem:[%s376 + $0x190] sm:$0xff] %vm237, %v369
        %403 = vst.msk [vmem:[%s376 + $0x1a8] sm:$0xff] %vm237, %v370
        %404 = vst.msk [vmem:[%s376 + $0x1b0] sm:$0xff] %vm237, %v371
        %405 = vst.msk [vmem:[%s376 + $0x1c8] sm:$0xff] %vm237, %v372
        %406 = vst.msk [vmem:[%s376 + $0x1d0] sm:$0xff] %vm237, %v373
        %407 = vst.msk [vmem:[%s376 + $0x1e8] sm:$0xff] %vm237, %v374
        %408 = vst.msk [vmem:[%s376 + $0x1f0] sm:$0xff] %vm237, %v375
        %v409 = vld [vmem:[%s233] sm:$0x1]
        %v410 = vld [vmem:[%s233 + $0x1] sm:$0x1]
        %v411 = vld [vmem:[%s233 + $0x2] sm:$0x1]
        %v412 = vld [vmem:[%s233 + $0x3] sm:$0x1]
        %v413 = vld [vmem:[%s233 + $0x4] sm:$0x1]
        %v414 = vld [vmem:[%s233 + $0x5] sm:$0x1]
        %v415 = vld [vmem:[%s233 + $0x6] sm:$0x1]
        %v416 = vld [vmem:[%s233 + $0x7] sm:$0x1]
        %v417 = vld [vmem:[%s233 + $0x8] sm:$0x1]
        %v418 = vld [vmem:[%s233 + $0x9] sm:$0x1]
        %v419 = vld [vmem:[%s233 + $0xa] sm:$0x1]
        %v420 = vld [vmem:[%s233 + $0xb] sm:$0x1]
        %v421 = vld [vmem:[%s233 + $0xc] sm:$0x1]
        %v422 = vld [vmem:[%s233 + $0xd] sm:$0x1]
        %v423 = vld [vmem:[%s233 + $0xe] sm:$0x1]
        %v424 = vld [vmem:[%s233 + $0xf] sm:$0x1]
        %v425 = vld [vmem:[%s233 + $0x10] sm:$0x1]
        %v426 = vld [vmem:[%s233 + $0x11] sm:$0x1]
        %v427 = vld [vmem:[%s233 + $0x12] sm:$0x1]
        %v428 = vld [vmem:[%s233 + $0x13] sm:$0x1]
        %v429 = vld [vmem:[%s233 + $0x14] sm:$0x1]
        %v430 = vld [vmem:[%s233 + $0x15] sm:$0x1]
        %v431 = vld [vmem:[%s233 + $0x16] sm:$0x1]
        %v432 = vld [vmem:[%s233 + $0x17] sm:$0x1]
        %v433 = vld [vmem:[%s233 + $0x18] sm:$0x1]
        %v434 = vld [vmem:[%s233 + $0x19] sm:$0x1]
        %v435 = vld [vmem:[%s233 + $0x1a] sm:$0x1]
        %v436 = vld [vmem:[%s233 + $0x1b] sm:$0x1]
        %v437 = vld [vmem:[%s233 + $0x1c] sm:$0x1]
        %v438 = vld [vmem:[%s233 + $0x1d] sm:$0x1]
        %v439 = vld [vmem:[%s233 + $0x1e] sm:$0x1]
        %v440 = vld [vmem:[%s236] sm:$0x1]
        loop: start=0, step=1, limit=16
        $region37: #{tpu_custom_call.1} parent=31 // loop_pre_header
          _
        $region38: #{tpu_custom_call.1} parent=31 // loop_header
          %s442 = sphi 0, %s446
          %p443 = scmp.ge.s32.totalorder %s442, 16
        $region39: #{tpu_custom_call.1} parent=31 // loop_header_branch
          %445 = sbr.rel (%p443) target = $region43
        $region40: #{tpu_custom_call.1} parent=31 // loop_body
          %s447 = sadd.s32 %s442, 6
          %s448 = smul.u32 %s447, 32
          %s449 = scalar_lea.vmem [#allocation2], %s448
          %v450 = vld [vmem:[%s449 + $0x8] sm:$0xff]
          %v451 = vld [vmem:[%s449 + $0x10] sm:$0xff]
          %v452 = vlaneseq
          %v453 = vshrl.u32 %v452, 7
          %v454 = vsub.s32 0, %v453
          %v455 = vrot.slane %v409, %v454
          %v456 = vmul.f32 %v455, %v450
          %v457 = vmul.f32 %v455, %v451
          %v459 = vlaneseq
          %v460 = vshrl.u32 %v459, 7
          %v461 = vsub.s32 0, %v460
          %v462 = vrot.slane %v440, %v461
          %v464 = vadd.f32 %v456, %v462
          %v465 = vadd.f32 %v457, %v462
          %s466 = sadd.s32 %s442, 5
          %s467 = smul.u32 %s466, 32
          %s468 = scalar_lea.vmem [#allocation2], %s467
          %v469 = vld [vmem:[%s468 + $0x7] sm:$0xff]
          %v470 = vld [vmem:[%s468 + $0xf] sm:$0xff]
          %v471 = vlaneseq
          %v472 = vshrl.u32 %v471, 7
          %v473 = vsub.s32 0, %v472
          %v474 = vrot.slane %v410, %v473
          %v475 = vmul.f32 %v474, %v469
          %v476 = vmul.f32 %v474, %v470
          %v477 = vadd.f32 %v464, %v475
          %v478 = vadd.f32 %v465, %v476
          %v479 = vld [vmem:[%s468 + $0x8] sm:$0xff]
          %v480 = vld [vmem:[%s468 + $0x10] sm:$0xff]
          %v481 = vlaneseq
          %v482 = vshrl.u32 %v481, 7
          %v483 = vsub.s32 0, %v482
          %v484 = vrot.slane %v411, %v483
          %v485 = vmul.f32 %v484, %v479
          %v486 = vmul.f32 %v484, %v480
          %v487 = vadd.f32 %v477, %v485
          %v488 = vadd.f32 %v478, %v486
          %v489 = vld [vmem:[%s468 + $0x9] sm:$0xff]
          %v490 = vld [vmem:[%s468 + $0x11] sm:$0xff]
          %v491 = vlaneseq
          %v492 = vshrl.u32 %v491, 7
          %v493 = vsub.s32 0, %v492
          %v494 = vrot.slane %v412, %v493
          %v495 = vmul.f32 %v494, %v489
          %v496 = vmul.f32 %v494, %v490
          %v497 = vadd.f32 %v487, %v495
          %v498 = vadd.f32 %v488, %v496
          %v499 = vld [vmem:[%s449 + $0x7] sm:$0xff]
          %v500 = vld [vmem:[%s449 + $0xf] sm:$0xff]
          %v501 = vlaneseq
          %v502 = vshrl.u32 %v501, 7
          %v503 = vsub.s32 0, %v502
          %v504 = vrot.slane %v413, %v503
          %v505 = vmul.f32 %v504, %v499
          %v506 = vmul.f32 %v504, %v500
          %v507 = vadd.f32 %v497, %v505
          %v508 = vadd.f32 %v498, %v506
          %v509 = vld [vmem:[%s449 + $0x9] sm:$0xff]
          %v510 = vld [vmem:[%s449 + $0x11] sm:$0xff]
          %v511 = vlaneseq
          %v512 = vshrl.u32 %v511, 7
          %v513 = vsub.s32 0, %v512
          %v514 = vrot.slane %v414, %v513
          %v515 = vmul.f32 %v514, %v509
          %v516 = vmul.f32 %v514, %v510
          %v517 = vadd.f32 %v507, %v515
          %v518 = vadd.f32 %v508, %v516
          %s519 = sadd.s32 %s442, 7
          %s520 = smul.u32 %s519, 32
          %s521 = scalar_lea.vmem [#allocation2], %s520
          %v522 = vld [vmem:[%s521 + $0x7] sm:$0xff]
          %v523 = vld [vmem:[%s521 + $0xf] sm:$0xff]
          %v524 = vlaneseq
          %v525 = vshrl.u32 %v524, 7
          %v526 = vsub.s32 0, %v525
          %v527 = vrot.slane %v415, %v526
          %v528 = vmul.f32 %v527, %v522
          %v529 = vmul.f32 %v527, %v523
          %v530 = vadd.f32 %v517, %v528
          %v531 = vadd.f32 %v518, %v529
          %v532 = vld [vmem:[%s521 + $0x8] sm:$0xff]
          %v533 = vld [vmem:[%s521 + $0x10] sm:$0xff]
          %v534 = vlaneseq
          %v535 = vshrl.u32 %v534, 7
          %v536 = vsub.s32 0, %v535
          %v537 = vrot.slane %v416, %v536
          %v538 = vmul.f32 %v537, %v532
          %v539 = vmul.f32 %v537, %v533
          %v540 = vadd.f32 %v530, %v538
          %v541 = vadd.f32 %v531, %v539
          %v542 = vld [vmem:[%s521 + $0x9] sm:$0xff]
          %v543 = vld [vmem:[%s521 + $0x11] sm:$0xff]
          %v544 = vlaneseq
          %v545 = vshrl.u32 %v544, 7
          %v546 = vsub.s32 0, %v545
          %v547 = vrot.slane %v417, %v546
          %v548 = vmul.f32 %v547, %v542
          %v549 = vmul.f32 %v547, %v543
          %v550 = vadd.f32 %v540, %v548
          %v551 = vadd.f32 %v541, %v549
          %v552 = vld [vmem:[%s449 + $0x1] sm:$0xff]
          %v553 = vlaneseq
          %v554 = vshrl.u32 %v553, 7
          %v555 = vsub.s32 0, %v554
          %v556 = vrot.slane %v418, %v555
          %v557 = vmul.f32 %v556, %v552
          %v558 = vmul.f32 %v556, %v509
          %v559 = vadd.f32 %v550, %v557
          %v560 = vadd.f32 %v551, %v558
          %v561 = vld [vmem:[%s449 + $0x2] sm:$0xff]
          %v562 = vld [vmem:[%s449 + $0xa] sm:$0xff]
          %v563 = vlaneseq
          %v564 = vshrl.u32 %v563, 7
          %v565 = vsub.s32 0, %v564
          %v566 = vrot.slane %v419, %v565
          %v567 = vmul.f32 %v566, %v561
          %v568 = vmul.f32 %v566, %v562
          %v569 = vadd.f32 %v559, %v567
          %v570 = vadd.f32 %v560, %v568
          %v571 = vld [vmem:[%s449 + $0x3] sm:$0xff]
          %v572 = vld [vmem:[%s449 + $0xb] sm:$0xff]
          %v573 = vlaneseq
          %v574 = vshrl.u32 %v573, 7
          %v575 = vsub.s32 0, %v574
          %v576 = vrot.slane %v420, %v575
          %v577 = vmul.f32 %v576, %v571
          %v578 = vmul.f32 %v576, %v572
          %v579 = vadd.f32 %v569, %v577
          %v580 = vadd.f32 %v570, %v578
          %v581 = vld [vmem:[%s449 + $0x4] sm:$0xff]
          %v582 = vld [vmem:[%s449 + $0xc] sm:$0xff]
          %v583 = vlaneseq
          %v584 = vshrl.u32 %v583, 7
          %v585 = vsub.s32 0, %v584
          %v586 = vrot.slane %v421, %v585
          %v587 = vmul.f32 %v586, %v581
          %v588 = vmul.f32 %v586, %v582
          %v589 = vadd.f32 %v579, %v587
          %v590 = vadd.f32 %v580, %v588
          %v591 = vld [vmem:[%s449 + $0x5] sm:$0xff]
          %v592 = vld [vmem:[%s449 + $0xd] sm:$0xff]
          %v593 = vlaneseq
          %v594 = vshrl.u32 %v593, 7
          %v595 = vsub.s32 0, %v594
          %v596 = vrot.slane %v422, %v595
          %v597 = vmul.f32 %v596, %v591
          %v598 = vmul.f32 %v596, %v592
          %v599 = vadd.f32 %v589, %v597
          %v600 = vadd.f32 %v590, %v598
          %v601 = vld [vmem:[%s449 + $0x6] sm:$0xff]
          %v602 = vld [vmem:[%s449 + $0xe] sm:$0xff]
          %v603 = vlaneseq
          %v604 = vshrl.u32 %v603, 7
          %v605 = vsub.s32 0, %v604
          %v606 = vrot.slane %v423, %v605
          %v607 = vmul.f32 %v606, %v601
          %v608 = vmul.f32 %v606, %v602
          %v609 = vadd.f32 %v599, %v607
          %v610 = vadd.f32 %v600, %v608
          %v611 = vld [vmem:[%s449 + $0x12] sm:$0xff]
          %v612 = vlaneseq
          %v613 = vshrl.u32 %v612, 7
          %v614 = vsub.s32 0, %v613
          %v615 = vrot.slane %v424, %v614
          %v616 = vmul.f32 %v615, %v562
          %v617 = vmul.f32 %v615, %v611
          %v618 = vadd.f32 %v609, %v616
          %v619 = vadd.f32 %v610, %v617
          %v620 = vld [vmem:[%s449 + $0x13] sm:$0xff]
          %v621 = vlaneseq
          %v622 = vshrl.u32 %v621, 7
          %v623 = vsub.s32 0, %v622
          %v624 = vrot.slane %v425, %v623
          %v625 = vmul.f32 %v624, %v572
          %v626 = vmul.f32 %v624, %v620
          %v627 = vadd.f32 %v618, %v625
          %v628 = vadd.f32 %v619, %v626
          %v629 = vld [vmem:[%s449 + $0x14] sm:$0xff]
          %v630 = vlaneseq
          %v631 = vshrl.u32 %v630, 7
          %v632 = vsub.s32 0, %v631
          %v633 = vrot.slane %v426, %v632
          %v634 = vmul.f32 %v633, %v582
          %v635 = vmul.f32 %v633, %v629
          %v636 = vadd.f32 %v627, %v634
          %v637 = vadd.f32 %v628, %v635
          %v638 = vld [vmem:[%s449 + $0x15] sm:$0xff]
          %v639 = vlaneseq
          %v640 = vshrl.u32 %v639, 7
          %v641 = vsub.s32 0, %v640
          %v642 = vrot.slane %v427, %v641
          %v643 = vmul.f32 %v642, %v592
          %v644 = vmul.f32 %v642, %v638
          %v645 = vadd.f32 %v636, %v643
          %v646 = vadd.f32 %v637, %v644
          %v647 = vld [vmem:[%s449 + $0x16] sm:$0xff]
          %v648 = vlaneseq
          %v649 = vshrl.u32 %v648, 7
          %v650 = vsub.s32 0, %v649
          %v651 = vrot.slane %v428, %v650
          %v652 = vmul.f32 %v651, %v602
          %v653 = vmul.f32 %v651, %v647
          %v654 = vadd.f32 %v645, %v652
          %v655 = vadd.f32 %v646, %v653
          %v656 = vld [vmem:[%s449 + $0x17] sm:$0xff]
          %v657 = vlaneseq
          %v658 = vshrl.u32 %v657, 7
          %v659 = vsub.s32 0, %v658
          %v660 = vrot.slane %v429, %v659
          %v661 = vmul.f32 %v660, %v500
          %v662 = vmul.f32 %v660, %v656
          %v663 = vadd.f32 %v654, %v661
          %v664 = vadd.f32 %v655, %v662
          %s665 = smul.u32 %s442, 32
          %s666 = scalar_lea.vmem [#allocation2], %s665
          %v667 = vld [vmem:[%s666 + $0x8] sm:$0xff]
          %v668 = vld [vmem:[%s666 + $0x10] sm:$0xff]
          %v669 = vlaneseq
          %v670 = vshrl.u32 %v669, 7
          %v671 = vsub.s32 0, %v670
          %v672 = vrot.slane %v430, %v671
          %v673 = vmul.f32 %v672, %v667
          %v674 = vmul.f32 %v672, %v668
          %v675 = vadd.f32 %v663, %v673
          %v676 = vadd.f32 %v664, %v674
          %s677 = sadd.s32 %s442, 1
          %s678 = smul.u32 %s677, 32
          %s679 = scalar_lea.vmem [#allocation2], %s678
          %v680 = vld [vmem:[%s679 + $0x8] sm:$0xff]
          %v681 = vld [vmem:[%s679 + $0x10] sm:$0xff]
          %v682 = vlaneseq
          %v683 = vshrl.u32 %v682, 7
          %v684 = vsub.s32 0, %v683
          %v685 = vrot.slane %v431, %v684
          %v686 = vmul.f32 %v685, %v680
          %v687 = vmul.f32 %v685, %v681
          %v688 = vadd.f32 %v675, %v686
          %v689 = vadd.f32 %v676, %v687
          %s690 = sadd.s32 %s442, 2
          %s691 = smul.u32 %s690, 32
          %s692 = scalar_lea.vmem [#allocation2], %s691
          %v693 = vld [vmem:[%s692 + $0x8] sm:$0xff]
          %v694 = vld [vmem:[%s692 + $0x10] sm:$0xff]
          %v695 = vlaneseq
          %v696 = vshrl.u32 %v695, 7
          %v697 = vsub.s32 0, %v696
          %v698 = vrot.slane %v432, %v697
          %v699 = vmul.f32 %v698, %v693
          %v700 = vmul.f32 %v698, %v694
          %v701 = vadd.f32 %v688, %v699
          %v702 = vadd.f32 %v689, %v700
          %s703 = sadd.s32 %s442, 3
          %s704 = smul.u32 %s703, 32
          %s705 = scalar_lea.vmem [#allocation2], %s704
          %v706 = vld [vmem:[%s705 + $0x8] sm:$0xff]
          %v707 = vld [vmem:[%s705 + $0x10] sm:$0xff]
          %v708 = vlaneseq
          %v709 = vshrl.u32 %v708, 7
          %v710 = vsub.s32 0, %v709
          %v711 = vrot.slane %v433, %v710
          %v712 = vmul.f32 %v711, %v706
          %v713 = vmul.f32 %v711, %v707
          %v714 = vadd.f32 %v701, %v712
          %v715 = vadd.f32 %v702, %v713
          %s716 = sadd.s32 %s442, 4
          %s717 = smul.u32 %s716, 32
          %s718 = scalar_lea.vmem [#allocation2], %s717
          %v719 = vld [vmem:[%s718 + $0x8] sm:$0xff]
          %v720 = vld [vmem:[%s718 + $0x10] sm:$0xff]
          %v721 = vlaneseq
          %v722 = vshrl.u32 %v721, 7
          %v723 = vsub.s32 0, %v722
          %v724 = vrot.slane %v434, %v723
          %v725 = vmul.f32 %v724, %v719
          %v726 = vmul.f32 %v724, %v720
          %v727 = vadd.f32 %v714, %v725
          %v728 = vadd.f32 %v715, %v726
          %s729 = sadd.s32 %s442, 8
          %s730 = smul.u32 %s729, 32
          %s731 = scalar_lea.vmem [#allocation2], %s730
          %v732 = vld [vmem:[%s731 + $0x8] sm:$0xff]
          %v733 = vld [vmem:[%s731 + $0x10] sm:$0xff]
          %v734 = vlaneseq
          %v735 = vshrl.u32 %v734, 7
          %v736 = vsub.s32 0, %v735
          %v737 = vrot.slane %v435, %v736
          %v738 = vmul.f32 %v737, %v732
          %v739 = vmul.f32 %v737, %v733
          %v740 = vadd.f32 %v727, %v738
          %v741 = vadd.f32 %v728, %v739
          %s742 = sadd.s32 %s442, 9
          %s743 = smul.u32 %s742, 32
          %s744 = scalar_lea.vmem [#allocation2], %s743
          %v745 = vld [vmem:[%s744 + $0x8] sm:$0xff]
          %v746 = vld [vmem:[%s744 + $0x10] sm:$0xff]
          %v747 = vlaneseq
          %v748 = vshrl.u32 %v747, 7
          %v749 = vsub.s32 0, %v748
          %v750 = vrot.slane %v436, %v749
          %v751 = vmul.f32 %v750, %v745
          %v752 = vmul.f32 %v750, %v746
          %v753 = vadd.f32 %v740, %v751
          %v754 = vadd.f32 %v741, %v752
          %s755 = sadd.s32 %s442, 10
          %s756 = smul.u32 %s755, 32
          %s757 = scalar_lea.vmem [#allocation2], %s756
          %v758 = vld [vmem:[%s757 + $0x8] sm:$0xff]
          %v759 = vld [vmem:[%s757 + $0x10] sm:$0xff]
          %v760 = vlaneseq
          %v761 = vshrl.u32 %v760, 7
          %v762 = vsub.s32 0, %v761
          %v763 = vrot.slane %v437, %v762
          %v764 = vmul.f32 %v763, %v758
          %v765 = vmul.f32 %v763, %v759
          %v766 = vadd.f32 %v753, %v764
          %v767 = vadd.f32 %v754, %v765
          %s768 = sadd.s32 %s442, 11
          %s769 = smul.u32 %s768, 32
          %s770 = scalar_lea.vmem [#allocation2], %s769
          %v771 = vld [vmem:[%s770 + $0x8] sm:$0xff]
          %v772 = vld [vmem:[%s770 + $0x10] sm:$0xff]
          %v773 = vlaneseq
          %v774 = vshrl.u32 %v773, 7
          %v775 = vsub.s32 0, %v774
          %v776 = vrot.slane %v438, %v775
          %v777 = vmul.f32 %v776, %v771
          %v778 = vmul.f32 %v776, %v772
          %v779 = vadd.f32 %v766, %v777
          %v780 = vadd.f32 %v767, %v778
          %s781 = sadd.s32 %s442, 12
          %s782 = smul.u32 %s781, 32
          %s783 = scalar_lea.vmem [#allocation2], %s782
          %v784 = vld [vmem:[%s783 + $0x8] sm:$0xff]
          %v785 = vld [vmem:[%s783 + $0x10] sm:$0xff]
          %v786 = vlaneseq
          %v787 = vshrl.u32 %v786, 7
          %v788 = vsub.s32 0, %v787
          %v789 = vrot.slane %v439, %v788
          %v790 = vmul.f32 %v789, %v784
          %v791 = vmul.f32 %v789, %v785
          %v792 = vadd.f32 %v779, %v790
          %v793 = vadd.f32 %v780, %v791
          %s794 = smul.u32 %s442, 16
          %s795 = scalar_lea.vmem %s229, %s794 [#allocation6]
          %796 = vst.msk [vmem:[%s795] sm:$0xff] %vm237, %v792
          %797 = vst.msk [vmem:[%s795 + $0x8] sm:$0xff] %vm237, %v793
        $region41: #{tpu_custom_call.1} parent=31 // loop_footer
          %s446 = sadd.s32 1, %s442
        $region42: #{tpu_custom_call.1} parent=31 // loop_footer_branch
          %441 = sbr.rel target = $region38
        $region43: #{tpu_custom_call.1} parent=31 // loop_exit
          _
        %s798 = sand.u32 %s122, 1
        %s799 = scalar_lea.sflag [#allocation5], %s798
        %s800 = sand.u32 %s122, 1
        %s801 = smul.addr %s800, 256
        %s802 = scalar_lea.vmem [#allocation6], %s801
        // Predicated region
        $region44: #{tpu_custom_call.1} parent=31 // pred_check
          %p803 = pneg %p132
        $region45: #{tpu_custom_call.1} parent=31 // pred_check_branch
          %805 = sbr.rel (%p803) target = $region47
        $region46: #{tpu_custom_call.1} parent=31 // pred_region
          %s807 = ssub.s32 4096, 4096
          %808 = vsyncadd %s799, %s807
          %s809 = smul.addr %s24, 32
          %s810 = sadd.s32 %s25, %s809
          %s811 = smul.addr %s810, 128
          %s812 = scalar_lea.hbm %s3, %s811
          %s813 = sshll.u32 %s802, 4
          %s814 = int_to_ptr.vmem [resolvable:$true] %s813
          %819 = dma.vmem_to_hbm [thread:$0]  %s814, 4096, %s812, %s799, 128, 128, 8
        $region47: #{tpu_custom_call.1} parent=31 // pred_fallthru
          _
      $region32: #{tpu_custom_call.1} parent=5 // pred_fallthru
        _
      %p820 = scmp.le.s32.totalorder 2, %s15
      // Predicated region
      $region48: #{tpu_custom_call.1} parent=5 // pred_check
        %p821 = pneg %p820
      $region49: #{tpu_custom_call.1} parent=5 // pred_check_branch
        %823 = sbr.rel (%p821) target = $region51
      $region50: #{tpu_custom_call.1} parent=5 // pred_region
        %s824 = ssub.s32 %s15, 2
        // Predicated region
        $region52: #{tpu_custom_call.1} parent=50 // pred_check
          %p825 = pneg %p138
        $region53: #{tpu_custom_call.1} parent=50 // pred_check_branch
          %827 = sbr.rel (%p825) target = $region55
        $region54: #{tpu_custom_call.1} parent=50 // pred_region
          %s828 = sand.u32 %s123, 1
          %s829 = scalar_lea.sflag [#allocation5], %s828
          %s830 = sand.u32 %s123, 1
          %s831 = smul.addr %s830, 256
          %s832 = scalar_lea.vmem [#allocation6], %s831
          %833 = dma.done %s829, 4096
        $region55: #{tpu_custom_call.1} parent=50 // pred_fallthru
          _
      $region51: #{tpu_custom_call.1} parent=5 // pred_fallthru
        _
    $region6: #{tpu_custom_call.1} parent=1 // loop_footer
      %s19 = sadd.s32 1, %s15
    $region7: #{tpu_custom_call.1} parent=1 // loop_footer_branch
      %14 = sbr.rel target = $region3
    $region8: #{tpu_custom_call.1} parent=1 // loop_exit
      _
    %834 = vsyncpa [#allocation4], 1
    %s835 = scalar_lea.sflag [#allocation4], 1
    %836 = vsyncpa %s835, 1
    %837 = vsyncpa [#allocation5], 1
    %s838 = scalar_lea.sflag [#allocation5], 1
    %839 = vsyncpa %s838, 1

</llo_original>
